<compile_context>
chip_gen: v7x
topology: tpu7x:2x2x1
jax: 0.10.0
libtpu: 0.0.40
codegen_flags: <defaults>
</compile_context>

<pallas_src>
import functools

import jax
import jax.numpy as jnp
from jax.experimental import pallas as pl
from jax.experimental.pallas import tpu as pltpu


# ----------------------------- in-kernel math helpers -----------------------------

def _gelu(x):
    # TODO(synk): PyTorch nn.GELU() is the exact-erf form; we use the tanh
    # approximation so the transcendental runs on the EUP slot (frees VALU).
    c = 0.7978845608028654  # sqrt(2/pi)
    return 0.5 * x * (1.0 + jnp.tanh(c * (x + 0.044715 * x * x * x)))


def _layernorm(x, g, b, eps=1e-5):
    mu = jnp.mean(x, axis=-1, keepdims=True)
    xc = x - mu
    var = jnp.mean(xc * xc, axis=-1, keepdims=True)
    inv = jax.lax.rsqrt(var + eps)
    return xc * inv * g + b


# ----------------------------- Pallas kernel -----------------------------

def fuse_kernel(flags_ref,                                   # scalar-prefetch (SMEM)
                text_ref, obj_ref, mask_ref,
                ln1gt_ref, ln1bt_ref, ln1go_ref, ln1bo_ref,
                w1at_ref, w1ao_ref, b1a_ref, w1b_ref, b1b_ref,
                ln2g_ref, ln2b_ref, w2a_ref, b2a_ref, w2b_ref, b2b_ref,
                ln3g_ref, ln3b_ref,
                out_ref):
    tile_flag = flags_ref[pl.program_id(0)]

    # tiles with no image tokens: pure passthrough of the text embeddings.
    @pl.when(tile_flag == 0)
    def _copy_only():
        out_ref[...] = text_ref[...].astype(out_ref.dtype)

    @pl.when(tile_flag != 0)
    def _fused():
        t = text_ref[...].astype(jnp.float32)   # (TM, D) text tokens
        o = obj_ref[...].astype(jnp.float32)    # (TM, D) aligned object embeds

        # ---- mlp1 over concat([text, obj], -1) without materializing the concat ----
        two_d = 2.0 * t.shape[-1]
        mu = (jnp.sum(t, axis=-1, keepdims=True) + jnp.sum(o, axis=-1, keepdims=True)) / two_d
        tc = t - mu
        oc = o - mu
        var = (jnp.sum(tc * tc, axis=-1, keepdims=True)
               + jnp.sum(oc * oc, axis=-1, keepdims=True)) / two_d
        inv = jax.lax.rsqrt(var + 1e-5)
        t_ln = tc * inv * ln1gt_ref[...] + ln1bt_ref[...]
        o_ln = oc * inv * ln1go_ref[...] + ln1bo_ref[...]

        h = (jnp.dot(t_ln.astype(w1at_ref.dtype), w1at_ref[...],
                     preferred_element_type=jnp.float32)
             + jnp.dot(o_ln.astype(w1ao_ref.dtype), w1ao_ref[...],
                       preferred_element_type=jnp.float32)
             + b1a_ref[...])
        h = _gelu(h)
        h = jnp.dot(h.astype(w1b_ref.dtype), w1b_ref[...],
                    preferred_element_type=jnp.float32) + b1b_ref[...]
        y = h + t                                  # mlp1(concat) + text_embeds

        # ---- mlp2 (residual) ----
        r = y
        h = _layernorm(y, ln2g_ref[...], ln2b_ref[...])
        h = jnp.dot(h.astype(w2a_ref.dtype), w2a_ref[...],
                    preferred_element_type=jnp.float32) + b2a_ref[...]
        h = _gelu(h)
        h = jnp.dot(h.astype(w2b_ref.dtype), w2b_ref[...],
                    preferred_element_type=jnp.float32) + b2b_ref[...]
        y = h + r

        # ---- final layer_norm ----
        y = _layernorm(y, ln3g_ref[...], ln3b_ref[...])

        # masked scatter: fused value at image-token positions, text elsewhere
        m = mask_ref[...]                          # (TM, 1) float32 {0,1}
        out_ref[...] = (t + m * (y - t)).astype(out_ref.dtype)


# ----------------------------- parameter setup -----------------------------

def init_params(key, embed_dim):
    d = embed_dim
    ks = jax.random.split(key, 8)

    def w(k, shape, scale=0.05):
        return (scale * jax.random.normal(k, shape)).astype(jnp.float32)

    return {
        # mlp1: LayerNorm(2d), Linear(2d->d), GELU, Linear(d->d)   (no residual)
        "ln1_g": jnp.ones((1, 2 * d), jnp.float32),
        "ln1_b": jnp.zeros((1, 2 * d), jnp.float32),
        "w1a": w(ks[0], (2 * d, d)),
        "b1a": w(ks[1], (1, d), 0.01),
        "w1b": w(ks[2], (d, d)),
        "b1b": w(ks[3], (1, d), 0.01),
        # mlp2: LayerNorm(d), Linear(d->d), GELU, Linear(d->d)     (residual)
        "ln2_g": jnp.ones((1, d), jnp.float32),
        "ln2_b": jnp.zeros((1, d), jnp.float32),
        "w2a": w(ks[4], (d, d)),
        "b2a": w(ks[5], (1, d), 0.01),
        "w2b": w(ks[6], (d, d)),
        "b2b": w(ks[7], (1, d), 0.01),
        # final LayerNorm(d)
        "ln3_g": jnp.ones((1, d), jnp.float32),
        "ln3_b": jnp.zeros((1, d), jnp.float32),
    }


# ----------------------------- glue: gather/align object embeddings -----------------------------

def _align_object_embeds(text_embeds, object_embeds, image_token_mask, num_objects):
    """Reproduces fuse_object_embeddings' gather ordering densely.

    The j-th True position (row-major over (B,S)) is paired with the j-th valid
    object token, where valid object tokens are object_embeds[b,k] rows with
    k < num_objects[b], flattened in (b, k, t) order.
    Assumes sum(image_token_mask) == sum(num_objects) * T (PyTorch would error
    otherwise); extra True positions silently reuse the last object row.
    """
    B, S, D = text_embeds.shape
    _, K, T, _ = object_embeds.shape
    N = B * S

    object_embeds = object_embeds.astype(text_embeds.dtype)
    valid = jnp.arange(K)[None, :] < num_objects[:, None]                 # (B, K)
    order = jnp.argsort(jnp.where(valid.reshape(-1), 0, 1), stable=True)  # valid rows first, in order
    obj_compact = object_embeds.reshape(B * K, T, D)[order].reshape(B * K * T, D)

    mask_flat = image_token_mask.reshape(N)
    rank = jnp.clip(jnp.cumsum(mask_flat.astype(jnp.int32)) - 1, 0, B * K * T - 1)
    # TODO(synk): this materializes an (N, D) aligned-object array in HBM; for
    # large N it could be folded into the kernel via scalar-prefetched ranks.
    obj_aligned = jnp.take(obj_compact, rank, axis=0)                     # (N, D), native dtype
    return obj_aligned, mask_flat.astype(jnp.float32).reshape(N, 1)


def _round_up(x, m):
    return ((x + m - 1) // m) * m


# ----------------------------- pallas_call wrapper -----------------------------

@functools.partial(jax.jit, static_argnames=("tile_m",))
def face_postfuse(text_embeds, object_embeds, image_token_mask, num_objects, params,
                  tile_m=256):
    B, S, D = text_embeds.shape
    N = B * S
    in_dtype = text_embeds.dtype
    in_bytes = jnp.dtype(in_dtype).itemsize

    # choose tile: big tiles amortize grid-step overhead & fill the MXU M dim;
    # tiny problems just use one tile rounded up to a sublane multiple of 8.
    if N <= tile_m:
        tile = max(8, _round_up(N, 8))
    else:
        tile = tile_m
    n_pad = _round_up(N, tile)
    num_tiles = n_pad // tile

    text_flat = text_embeds.reshape(N, D)
    obj_aligned, mask_f = _align_object_embeds(
        text_embeds, object_embeds, image_token_mask, num_objects)

    pad = n_pad - N
    if pad:
        text_flat = jnp.pad(text_flat, ((0, pad), (0, 0)))
        obj_aligned = jnp.pad(obj_aligned, ((0, pad), (0, 0)))
        mask_f = jnp.pad(mask_f, ((0, pad), (0, 0)))

    # per-tile "any image token" flags, scalar-prefetched into SMEM.
    flags = (jnp.max(mask_f[:, 0].reshape(num_tiles, tile), axis=1) > 0.0).astype(jnp.int32)

    # weights in bf16 (MXU rate + half the weight HBM/VMEM); LN params / biases in f32.
    wdt = jnp.bfloat16
    p = params
    param_list = [
        p["ln1_g"][:, :D], p["ln1_b"][:, :D], p["ln1_g"][:, D:], p["ln1_b"][:, D:],
        p["w1a"][:D, :].astype(wdt), p["w1a"][D:, :].astype(wdt), p["b1a"],
        p["w1b"].astype(wdt), p["b1b"],
        p["ln2_g"], p["ln2_b"], p["w2a"].astype(wdt), p["b2a"],
        p["w2b"].astype(wdt), p["b2b"],
        p["ln3_g"], p["ln3_b"],
    ]

    row_spec = pl.BlockSpec((tile, D), lambda i, flags: (i, 0))
    mask_spec = pl.BlockSpec((tile, 1), lambda i, flags: (i, 0))
    full_specs = [pl.BlockSpec(q.shape, lambda i, flags, nd=q.ndim: (0,) * nd)
                  for q in param_list]

    # advisory cost for XLA scheduling of the surrounding gather glue.
    flops = 10 * n_pad * D * D                     # 4 matmuls, 2*MAC each
    transcendentals = 2 * n_pad * D                # two tanh-GELUs per token
    bytes_accessed = int(n_pad * D * in_bytes * 3  # text + obj in, out
                         + n_pad * 4               # mask
                         + 5 * D * D * 2           # bf16 weights
                         + 12 * D * 4)             # biases + LN params

    # VMEM budget: row blocks double-buffered; weights counted 2x conservatively.
    vmem_est = (2 * (2 * tile * D * in_bytes + tile * 4 + tile * D * in_bytes)
                + 2 * (5 * D * D * 2 + 12 * D * 4))
    vmem_limit = None
    if vmem_est > 30 * 1024 * 1024:
        vmem_limit = int(min(vmem_est * 3 // 2, 100 * 1024 * 1024))
    # TODO(synk): for very large D on v7x (64 MiB VMEM), additionally single-buffer
    # the constant-index weight blocks (pipeline_mode=pl.Buffered(1)) or K-tile the
    # reduction; kept at default buffering here for portability.

    out = pl.pallas_call(
        fuse_kernel,
        out_shape=jax.ShapeDtypeStruct((n_pad, D), in_dtype),
        grid_spec=pltpu.PrefetchScalarGridSpec(
            num_scalar_prefetch=1,
            grid=(num_tiles,),
            in_specs=[row_spec, row_spec, mask_spec] + full_specs,
            out_specs=row_spec,
        ),
        compiler_params=pltpu.CompilerParams(
            dimension_semantics=("parallel",),
            vmem_limit_bytes=vmem_limit),
        cost_estimate=pl.CostEstimate(
            flops=flops, transcendentals=transcendentals,
            bytes_accessed=bytes_accessed),
    )(flags, text_flat, obj_aligned, mask_f, *param_list)

    return out[:N].reshape(B, S, D)


# ----------------------------- pure-JAX reference (for verification) -----------------------------

def ref_forward(text_embeds, object_embeds, image_token_mask, num_objects, params):
    B, S, D = text_embeds.shape
    N = B * S
    t = text_embeds.reshape(N, D).astype(jnp.float32)
    o, m = _align_object_embeds(text_embeds, object_embeds, image_token_mask, num_objects)
    o = o.astype(jnp.float32)

    def ln(x, g, b, eps=1e-5):
        mu = jnp.mean(x, -1, keepdims=True)
        var = jnp.mean((x - mu) ** 2, -1, keepdims=True)
        return (x - mu) / jnp.sqrt(var + eps) * g + b

    def gelu_exact(x):
        return 0.5 * x * (1.0 + jax.scipy.special.erf(x / jnp.sqrt(2.0)))

    p = params
    x = jnp.concatenate([t, o], axis=-1)
    h = ln(x, p["ln1_g"], p["ln1_b"])
    h = gelu_exact(h @ p["w1a"] + p["b1a"]) @ p["w1b"] + p["b1b"]
    y = h + t
    r = y
    h = ln(y, p["ln2_g"], p["ln2_b"])
    h = gelu_exact(h @ p["w2a"] + p["b2a"]) @ p["w2b"] + p["b2b"]
    y = ln(h + r, p["ln3_g"], p["ln3_b"])
    out = m * y + (1.0 - m) * t
    return out.reshape(B, S, D)


# ----------------------------- main -----------------------------

if __name__ == "__main__":
    B, S, D = 2, 64, 32         # batch, seq, embed_dim (small test shapes)
    K, T = 2, 2                 # max_num_objects, tokens per object

    key = jax.random.PRNGKey(0)
    k_param, k_text, k_obj = jax.random.split(key, 3)

    params = init_params(k_param, D)
    text_embeds = jax.random.normal(k_text, (B, S, D), jnp.float32)
    object_embeds = jax.random.normal(k_obj, (B, K, T, D), jnp.float32)

    num_objects = jnp.array([2, 1], jnp.int32)
    # per-batch number of image tokens == num_objects[b] * T  (4 and 2)
    image_token_mask = jnp.zeros((B, S), bool)
    image_token_mask = image_token_mask.at[0, jnp.array([1, 2, 5, 6])].set(True)
    image_token_mask = image_token_mask.at[1, jnp.array([3, 4])].set(True)

    ref = ref_forward(text_embeds, object_embeds, image_token_mask, num_objects, params)

    # tolerance accounts for bf16 matmul operands + tanh-approximate GELU.
    TOL = 3e-2

    # 1) default big-tile path (single padded tile for this small problem)
    out = face_postfuse(text_embeds, object_embeds, image_token_mask, num_objects, params)
    out = jax.block_until_ready(out)
    assert out.shape == (B, S, D)
    assert jnp.max(jnp.abs(out - ref)) < TOL, float(jnp.max(jnp.abs(out - ref)))

    # 2) multi-tile path exercising row padding + pl.when tile skipping
    out2 = face_postfuse(text_embeds, object_embeds, image_token_mask, num_objects, params,
                         tile_m=48)
    out2 = jax.block_until_ready(out2)
    assert jnp.max(jnp.abs(out2 - ref)) < TOL, float(jnp.max(jnp.abs(out2 - ref)))

    print("KERNEL_OK")
</pallas_src>

<mosaic_0001>
module attributes {stable_mosaic.version = 11 : i64} {
  func.func @fuse_kernel(%arg0: i32, %arg1: memref<1xi32, #tpu.memory_space<smem>>, %arg2: memref<128x32xf32, #tpu.memory_space<vmem>>, %arg3: memref<128x32xf32, #tpu.memory_space<vmem>>, %arg4: memref<128x1xf32, #tpu.memory_space<vmem>>, %arg5: memref<1x32xf32, #tpu.memory_space<vmem>>, %arg6: memref<1x32xf32, #tpu.memory_space<vmem>>, %arg7: memref<1x32xf32, #tpu.memory_space<vmem>>, %arg8: memref<1x32xf32, #tpu.memory_space<vmem>>, %arg9: memref<32x32xbf16, #tpu.memory_space<vmem>>, %arg10: memref<32x32xbf16, #tpu.memory_space<vmem>>, %arg11: memref<1x32xf32, #tpu.memory_space<vmem>>, %arg12: memref<32x32xbf16, #tpu.memory_space<vmem>>, %arg13: memref<1x32xf32, #tpu.memory_space<vmem>>, %arg14: memref<1x32xf32, #tpu.memory_space<vmem>>, %arg15: memref<1x32xf32, #tpu.memory_space<vmem>>, %arg16: memref<32x32xbf16, #tpu.memory_space<vmem>>, %arg17: memref<1x32xf32, #tpu.memory_space<vmem>>, %arg18: memref<32x32xbf16, #tpu.memory_space<vmem>>, %arg19: memref<1x32xf32, #tpu.memory_space<vmem>>, %arg20: memref<1x32xf32, #tpu.memory_space<vmem>>, %arg21: memref<1x32xf32, #tpu.memory_space<vmem>>, %arg22: memref<128x32xf32, #tpu.memory_space<vmem>>) attributes {dimension_semantics = [#tpu.dimension_semantics<parallel>], iteration_bounds = array<i64: 1>, scalar_prefetch = 1 : i64, scratch_operands = 0 : i64, tpu.core_type = #tpu.core_type<tc>, window_params = [{transform_indices = @transform_0, window_bounds = array<i64: 128, 32>}, {transform_indices = @transform_1, window_bounds = array<i64: 128, 32>}, {transform_indices = @transform_2, window_bounds = array<i64: 128, 1>}, {pipeline_mode = #tpu.pipeline_mode<synchronous>, transform_indices = @transform_3, window_bounds = array<i64: 1, 32>}, {pipeline_mode = #tpu.pipeline_mode<synchronous>, transform_indices = @transform_4, window_bounds = array<i64: 1, 32>}, {pipeline_mode = #tpu.pipeline_mode<synchronous>, transform_indices = @transform_5, window_bounds = array<i64: 1, 32>}, {pipeline_mode = #tpu.pipeline_mode<synchronous>, transform_indices = @transform_6, window_bounds = array<i64: 1, 32>}, {pipeline_mode = #tpu.pipeline_mode<synchronous>, transform_indices = @transform_7, window_bounds = array<i64: 32, 32>}, {pipeline_mode = #tpu.pipeline_mode<synchronous>, transform_indices = @transform_8, window_bounds = array<i64: 32, 32>}, {pipeline_mode = #tpu.pipeline_mode<synchronous>, transform_indices = @transform_9, window_bounds = array<i64: 1, 32>}, {pipeline_mode = #tpu.pipeline_mode<synchronous>, transform_indices = @transform_10, window_bounds = array<i64: 32, 32>}, {pipeline_mode = #tpu.pipeline_mode<synchronous>, transform_indices = @transform_11, window_bounds = array<i64: 1, 32>}, {pipeline_mode = #tpu.pipeline_mode<synchronous>, transform_indices = @transform_12, window_bounds = array<i64: 1, 32>}, {pipeline_mode = #tpu.pipeline_mode<synchronous>, transform_indices = @transform_13, window_bounds = array<i64: 1, 32>}, {pipeline_mode = #tpu.pipeline_mode<synchronous>, transform_indices = @transform_14, window_bounds = array<i64: 32, 32>}, {pipeline_mode = #tpu.pipeline_mode<synchronous>, transform_indices = @transform_15, window_bounds = array<i64: 1, 32>}, {pipeline_mode = #tpu.pipeline_mode<synchronous>, transform_indices = @transform_16, window_bounds = array<i64: 32, 32>}, {pipeline_mode = #tpu.pipeline_mode<synchronous>, transform_indices = @transform_17, window_bounds = array<i64: 1, 32>}, {pipeline_mode = #tpu.pipeline_mode<synchronous>, transform_indices = @transform_18, window_bounds = array<i64: 1, 32>}, {pipeline_mode = #tpu.pipeline_mode<synchronous>, transform_indices = @transform_19, window_bounds = array<i64: 1, 32>}, {transform_indices = @transform_20, window_bounds = array<i64: 128, 32>}]} {
    %0 = arith.index_cast %arg0 : i32 to index
    %1 = memref.load %arg1[%0] : memref<1xi32, #tpu.memory_space<smem>>
    %c0_i32 = arith.constant 0 : i32
    %2 = arith.cmpi eq, %1, %c0_i32 : i32
    %3 = arith.extui %2 : i1 to i32
    %c0_i32_0 = arith.constant 0 : i32
    %4 = arith.cmpi ne, %3, %c0_i32_0 : i32
    scf.if %4 {
      %c0 = arith.constant 0 : index
      %c0_3 = arith.constant 0 : index
      %8 = vector.load %arg2[%c0, %c0_3] : memref<128x32xf32, #tpu.memory_space<vmem>>, vector<128x32xf32>
      %c0_4 = arith.constant 0 : index
      %c0_5 = arith.constant 0 : index
      %9 = vector.load %arg22[%c0_4, %c0_5] : memref<128x32xf32, #tpu.memory_space<vmem>>, vector<128x32xf32>
      tpu.vector_store %arg22[%c0_4, %c0_5], %8 {strides = array<i32>} : memref<128x32xf32, #tpu.memory_space<vmem>>, vector<128x32xf32>,
    } else {
    }
    %c0_i32_1 = arith.constant 0 : i32
    %5 = arith.cmpi ne, %1, %c0_i32_1 : i32
    %6 = arith.extui %5 : i1 to i32
    %c0_i32_2 = arith.constant 0 : i32
    %7 = arith.cmpi ne, %6, %c0_i32_2 : i32
    scf.if %7 {
      %c0 = arith.constant 0 : index
      %c0_3 = arith.constant 0 : index
      %8 = vector.load %arg2[%c0, %c0_3] : memref<128x32xf32, #tpu.memory_space<vmem>>, vector<128x32xf32>
      %c0_4 = arith.constant 0 : index
      %c0_5 = arith.constant 0 : index
      %9 = vector.load %arg3[%c0_4, %c0_5] : memref<128x32xf32, #tpu.memory_space<vmem>>, vector<128x32xf32>
      %cst = arith.constant dense<0.000000e+00> : vector<128xf32>
      %10 = vector.multi_reduction <add>, %8, %cst [1] : vector<128x32xf32> to vector<128xf32>
      %11 = vector.shape_cast %10 : vector<128xf32> to vector<128x1xf32>
      %cst_6 = arith.constant dense<0.000000e+00> : vector<128xf32>
      %12 = vector.multi_reduction <add>, %9, %cst_6 [1] : vector<128x32xf32> to vector<128xf32>
      %13 = vector.shape_cast %12 : vector<128xf32> to vector<128x1xf32>
      %14 = arith.addf %11, %13 : vector<128x1xf32>
      %cst_7 = arith.constant 6.400000e+01 : f32
      %15 = vector.broadcast %cst_7 : f32 to vector<128x1xf32>
      %16 = arith.divf %14, %15 : vector<128x1xf32>
      %17 = vector.broadcast %16 : vector<128x1xf32> to vector<128x32xf32>
      %18 = arith.subf %8, %17 : vector<128x32xf32>
      %19 = vector.broadcast %16 : vector<128x1xf32> to vector<128x32xf32>
      %20 = arith.subf %9, %19 : vector<128x32xf32>
      %21 = arith.mulf %18, %18 : vector<128x32xf32>
      %cst_8 = arith.constant dense<0.000000e+00> : vector<128xf32>
      %22 = vector.multi_reduction <add>, %21, %cst_8 [1] : vector<128x32xf32> to vector<128xf32>
      %23 = vector.shape_cast %22 : vector<128xf32> to vector<128x1xf32>
      %24 = arith.mulf %20, %20 : vector<128x32xf32>
      %cst_9 = arith.constant dense<0.000000e+00> : vector<128xf32>
      %25 = vector.multi_reduction <add>, %24, %cst_9 [1] : vector<128x32xf32> to vector<128xf32>
      %26 = vector.shape_cast %25 : vector<128xf32> to vector<128x1xf32>
      %27 = arith.addf %23, %26 : vector<128x1xf32>
      %cst_10 = arith.constant 6.400000e+01 : f32
      %28 = vector.broadcast %cst_10 : f32 to vector<128x1xf32>
      %29 = arith.divf %27, %28 : vector<128x1xf32>
      %cst_11 = arith.constant 9.99999974E-6 : f32
      %30 = vector.broadcast %cst_11 : f32 to vector<128x1xf32>
      %31 = arith.addf %29, %30 : vector<128x1xf32>
      %32 = math.rsqrt %31 : vector<128x1xf32>
      %33 = vector.broadcast %32 : vector<128x1xf32> to vector<128x32xf32>
      %34 = arith.mulf %18, %33 : vector<128x32xf32>
      %c0_12 = arith.constant 0 : index
      %c0_13 = arith.constant 0 : index
      %35 = vector.load %arg5[%c0_12, %c0_13] : memref<1x32xf32, #tpu.memory_space<vmem>>, vector<1x32xf32>
      %36 = vector.broadcast %35 : vector<1x32xf32> to vector<128x32xf32>
      %37 = arith.mulf %34, %36 : vector<128x32xf32>
      %c0_14 = arith.constant 0 : index
      %c0_15 = arith.constant 0 : index
      %38 = vector.load %arg6[%c0_14, %c0_15] : memref<1x32xf32, #tpu.memory_space<vmem>>, vector<1x32xf32>
      %39 = vector.broadcast %38 : vector<1x32xf32> to vector<128x32xf32>
      %40 = arith.addf %37, %39 : vector<128x32xf32>
      %41 = vector.broadcast %32 : vector<128x1xf32> to vector<128x32xf32>
      %42 = arith.mulf %20, %41 : vector<128x32xf32>
      %c0_16 = arith.constant 0 : index
      %c0_17 = arith.constant 0 : index
      %43 = vector.load %arg7[%c0_16, %c0_17] : memref<1x32xf32, #tpu.memory_space<vmem>>, vector<1x32xf32>
      %44 = vector.broadcast %43 : vector<1x32xf32> to vector<128x32xf32>
      %45 = arith.mulf %42, %44 : vector<128x32xf32>
      %c0_18 = arith.constant 0 : index
      %c0_19 = arith.constant 0 : index
      %46 = vector.load %arg8[%c0_18, %c0_19] : memref<1x32xf32, #tpu.memory_space<vmem>>, vector<1x32xf32>
      %47 = vector.broadcast %46 : vector<1x32xf32> to vector<128x32xf32>
      %48 = arith.addf %45, %47 : vector<128x32xf32>
      %49 = arith.truncf %40 : vector<128x32xf32> to vector<128x32xbf16>
      %c0_20 = arith.constant 0 : index
      %c0_21 = arith.constant 0 : index
      %50 = vector.load %arg9[%c0_20, %c0_21] : memref<32x32xbf16, #tpu.memory_space<vmem>>, vector<32x32xbf16>
      %cst_22 = arith.constant dense<0.000000e+00> : vector<128x32xf32>
      %51 = tpu.matmul %49, %50, %cst_22 {dimension_numbers = #tpu.dot_dimension_numbers<[1], [0], [0], [1], [0, 0, 1, 1], [], []>} : vector<128x32xbf16>, vector<32x32xbf16>, vector<128x32xf32> -> vector<128x32xf32>
      %52 = arith.truncf %48 : vector<128x32xf32> to vector<128x32xbf16>
      %c0_23 = arith.constant 0 : index
      %c0_24 = arith.constant 0 : index
      %53 = vector.load %arg10[%c0_23, %c0_24] : memref<32x32xbf16, #tpu.memory_space<vmem>>, vector<32x32xbf16>
      %cst_25 = arith.constant dense<0.000000e+00> : vector<128x32xf32>
      %54 = tpu.matmul %52, %53, %cst_25 {dimension_numbers = #tpu.dot_dimension_numbers<[1], [0], [0], [1], [0, 0, 1, 1], [], []>} : vector<128x32xbf16>, vector<32x32xbf16>, vector<128x32xf32> -> vector<128x32xf32>
      %55 = arith.addf %51, %54 : vector<128x32xf32>
      %c0_26 = arith.constant 0 : index
      %c0_27 = arith.constant 0 : index
      %56 = vector.load %arg11[%c0_26, %c0_27] : memref<1x32xf32, #tpu.memory_space<vmem>>, vector<1x32xf32>
      %57 = vector.broadcast %56 : vector<1x32xf32> to vector<128x32xf32>
      %58 = arith.addf %55, %57 : vector<128x32xf32>
      %cst_28 = arith.constant 5.000000e-01 : f32
      %59 = vector.broadcast %cst_28 : f32 to vector<128x32xf32>
      %60 = arith.mulf %59, %58 : vector<128x32xf32>
      %cst_29 = arith.constant 4.471500e-02 : f32
      %61 = vector.broadcast %cst_29 : f32 to vector<128x32xf32>
      %62 = arith.mulf %61, %58 : vector<128x32xf32>
      %63 = arith.mulf %62, %58 : vector<128x32xf32>
      %64 = arith.mulf %63, %58 : vector<128x32xf32>
      %65 = arith.addf %58, %64 : vector<128x32xf32>
      %cst_30 = arith.constant 0.797884583 : f32
      %66 = vector.broadcast %cst_30 : f32 to vector<128x32xf32>
      %67 = arith.mulf %66, %65 : vector<128x32xf32>
      %68 = math.tanh %67 : vector<128x32xf32>
      %cst_31 = arith.constant 1.000000e+00 : f32
      %69 = vector.broadcast %cst_31 : f32 to vector<128x32xf32>
      %70 = arith.addf %69, %68 : vector<128x32xf32>
      %71 = arith.mulf %60, %70 : vector<128x32xf32>
      %72 = arith.truncf %71 : vector<128x32xf32> to vector<128x32xbf16>
      %c0_32 = arith.constant 0 : index
      %c0_33 = arith.constant 0 : index
      %73 = vector.load %arg12[%c0_32, %c0_33] : memref<32x32xbf16, #tpu.memory_space<vmem>>, vector<32x32xbf16>
      %cst_34 = arith.constant dense<0.000000e+00> : vector<128x32xf32>
      %74 = tpu.matmul %72, %73, %cst_34 {dimension_numbers = #tpu.dot_dimension_numbers<[1], [0], [0], [1], [0, 0, 1, 1], [], []>} : vector<128x32xbf16>, vector<32x32xbf16>, vector<128x32xf32> -> vector<128x32xf32>
      %c0_35 = arith.constant 0 : index
      %c0_36 = arith.constant 0 : index
      %75 = vector.load %arg13[%c0_35, %c0_36] : memref<1x32xf32, #tpu.memory_space<vmem>>, vector<1x32xf32>
      %76 = vector.broadcast %75 : vector<1x32xf32> to vector<128x32xf32>
      %77 = arith.addf %74, %76 : vector<128x32xf32>
      %78 = arith.addf %77, %8 : vector<128x32xf32>
      %c0_37 = arith.constant 0 : index
      %c0_38 = arith.constant 0 : index
      %79 = vector.load %arg14[%c0_37, %c0_38] : memref<1x32xf32, #tpu.memory_space<vmem>>, vector<1x32xf32>
      %c0_39 = arith.constant 0 : index
      %c0_40 = arith.constant 0 : index
      %80 = vector.load %arg15[%c0_39, %c0_40] : memref<1x32xf32, #tpu.memory_space<vmem>>, vector<1x32xf32>
      %cst_41 = arith.constant dense<0.000000e+00> : vector<128xf32>
      %81 = vector.multi_reduction <add>, %78, %cst_41 [1] : vector<128x32xf32> to vector<128xf32>
      %82 = vector.shape_cast %81 : vector<128xf32> to vector<128x1xf32>
      %cst_42 = arith.constant 3.200000e+01 : f32
      %83 = vector.broadcast %cst_42 : f32 to vector<128x1xf32>
      %84 = arith.divf %82, %83 : vector<128x1xf32>
      %85 = vector.broadcast %84 : vector<128x1xf32> to vector<128x32xf32>
      %86 = arith.subf %78, %85 : vector<128x32xf32>
      %87 = arith.mulf %86, %86 : vector<128x32xf32>
      %cst_43 = arith.constant dense<0.000000e+00> : vector<128xf32>
      %88 = vector.multi_reduction <add>, %87, %cst_43 [1] : vector<128x32xf32> to vector<128xf32>
      %89 = vector.shape_cast %88 : vector<128xf32> to vector<128x1xf32>
      %cst_44 = arith.constant 3.200000e+01 : f32
      %90 = vector.broadcast %cst_44 : f32 to vector<128x1xf32>
      %91 = arith.divf %89, %90 : vector<128x1xf32>
      %cst_45 = arith.constant 9.99999974E-6 : f32
      %92 = vector.broadcast %cst_45 : f32 to vector<128x1xf32>
      %93 = arith.addf %91, %92 : vector<128x1xf32>
      %94 = math.rsqrt %93 : vector<128x1xf32>
      %95 = vector.broadcast %94 : vector<128x1xf32> to vector<128x32xf32>
      %96 = arith.mulf %86, %95 : vector<128x32xf32>
      %97 = vector.broadcast %79 : vector<1x32xf32> to vector<128x32xf32>
      %98 = arith.mulf %96, %97 : vector<128x32xf32>
      %99 = vector.broadcast %80 : vector<1x32xf32> to vector<128x32xf32>
      %100 = arith.addf %98, %99 : vector<128x32xf32>
      %101 = arith.truncf %100 : vector<128x32xf32> to vector<128x32xbf16>
      %c0_46 = arith.constant 0 : index
      %c0_47 = arith.constant 0 : index
      %102 = vector.load %arg16[%c0_46, %c0_47] : memref<32x32xbf16, #tpu.memory_space<vmem>>, vector<32x32xbf16>
      %cst_48 = arith.constant dense<0.000000e+00> : vector<128x32xf32>
      %103 = tpu.matmul %101, %102, %cst_48 {dimension_numbers = #tpu.dot_dimension_numbers<[1], [0], [0], [1], [0, 0, 1, 1], [], []>} : vector<128x32xbf16>, vector<32x32xbf16>, vector<128x32xf32> -> vector<128x32xf32>
      %c0_49 = arith.constant 0 : index
      %c0_50 = arith.constant 0 : index
      %104 = vector.load %arg17[%c0_49, %c0_50] : memref<1x32xf32, #tpu.memory_space<vmem>>, vector<1x32xf32>
      %105 = vector.broadcast %104 : vector<1x32xf32> to vector<128x32xf32>
      %106 = arith.addf %103, %105 : vector<128x32xf32>
      %cst_51 = arith.constant 5.000000e-01 : f32
      %107 = vector.broadcast %cst_51 : f32 to vector<128x32xf32>
      %108 = arith.mulf %107, %106 : vector<128x32xf32>
      %cst_52 = arith.constant 4.471500e-02 : f32
      %109 = vector.broadcast %cst_52 : f32 to vector<128x32xf32>
      %110 = arith.mulf %109, %106 : vector<128x32xf32>
      %111 = arith.mulf %110, %106 : vector<128x32xf32>
      %112 = arith.mulf %111, %106 : vector<128x32xf32>
      %113 = arith.addf %106, %112 : vector<128x32xf32>
      %cst_53 = arith.constant 0.797884583 : f32
      %114 = vector.broadcast %cst_53 : f32 to vector<128x32xf32>
      %115 = arith.mulf %114, %113 : vector<128x32xf32>
      %116 = math.tanh %115 : vector<128x32xf32>
      %cst_54 = arith.constant 1.000000e+00 : f32
      %117 = vector.broadcast %cst_54 : f32 to vector<128x32xf32>
      %118 = arith.addf %117, %116 : vector<128x32xf32>
      %119 = arith.mulf %108, %118 : vector<128x32xf32>
      %120 = arith.truncf %119 : vector<128x32xf32> to vector<128x32xbf16>
      %c0_55 = arith.constant 0 : index
      %c0_56 = arith.constant 0 : index
      %121 = vector.load %arg18[%c0_55, %c0_56] : memref<32x32xbf16, #tpu.memory_space<vmem>>, vector<32x32xbf16>
      %cst_57 = arith.constant dense<0.000000e+00> : vector<128x32xf32>
      %122 = tpu.matmul %120, %121, %cst_57 {dimension_numbers = #tpu.dot_dimension_numbers<[1], [0], [0], [1], [0, 0, 1, 1], [], []>} : vector<128x32xbf16>, vector<32x32xbf16>, vector<128x32xf32> -> vector<128x32xf32>
      %c0_58 = arith.constant 0 : index
      %c0_59 = arith.constant 0 : index
      %123 = vector.load %arg19[%c0_58, %c0_59] : memref<1x32xf32, #tpu.memory_space<vmem>>, vector<1x32xf32>
      %124 = vector.broadcast %123 : vector<1x32xf32> to vector<128x32xf32>
      %125 = arith.addf %122, %124 : vector<128x32xf32>
      %126 = arith.addf %125, %78 : vector<128x32xf32>
      %c0_60 = arith.constant 0 : index
      %c0_61 = arith.constant 0 : index
      %127 = vector.load %arg20[%c0_60, %c0_61] : memref<1x32xf32, #tpu.memory_space<vmem>>, vector<1x32xf32>
      %c0_62 = arith.constant 0 : index
      %c0_63 = arith.constant 0 : index
      %128 = vector.load %arg21[%c0_62, %c0_63] : memref<1x32xf32, #tpu.memory_space<vmem>>, vector<1x32xf32>
      %cst_64 = arith.constant dense<0.000000e+00> : vector<128xf32>
      %129 = vector.multi_reduction <add>, %126, %cst_64 [1] : vector<128x32xf32> to vector<128xf32>
      %130 = vector.shape_cast %129 : vector<128xf32> to vector<128x1xf32>
      %cst_65 = arith.constant 3.200000e+01 : f32
      %131 = vector.broadcast %cst_65 : f32 to vector<128x1xf32>
      %132 = arith.divf %130, %131 : vector<128x1xf32>
      %133 = vector.broadcast %132 : vector<128x1xf32> to vector<128x32xf32>
      %134 = arith.subf %126, %133 : vector<128x32xf32>
      %135 = arith.mulf %134, %134 : vector<128x32xf32>
      %cst_66 = arith.constant dense<0.000000e+00> : vector<128xf32>
      %136 = vector.multi_reduction <add>, %135, %cst_66 [1] : vector<128x32xf32> to vector<128xf32>
      %137 = vector.shape_cast %136 : vector<128xf32> to vector<128x1xf32>
      %cst_67 = arith.constant 3.200000e+01 : f32
      %138 = vector.broadcast %cst_67 : f32 to vector<128x1xf32>
      %139 = arith.divf %137, %138 : vector<128x1xf32>
      %cst_68 = arith.constant 9.99999974E-6 : f32
      %140 = vector.broadcast %cst_68 : f32 to vector<128x1xf32>
      %141 = arith.addf %139, %140 : vector<128x1xf32>
      %142 = math.rsqrt %141 : vector<128x1xf32>
      %143 = vector.broadcast %142 : vector<128x1xf32> to vector<128x32xf32>
      %144 = arith.mulf %134, %143 : vector<128x32xf32>
      %145 = vector.broadcast %127 : vector<1x32xf32> to vector<128x32xf32>
      %146 = arith.mulf %144, %145 : vector<128x32xf32>
      %147 = vector.broadcast %128 : vector<1x32xf32> to vector<128x32xf32>
      %148 = arith.addf %146, %147 : vector<128x32xf32>
      %c0_69 = arith.constant 0 : index
      %c0_70 = arith.constant 0 : index
      %149 = vector.load %arg4[%c0_69, %c0_70] : memref<128x1xf32, #tpu.memory_space<vmem>>, vector<128x1xf32>
      %150 = arith.subf %148, %8 : vector<128x32xf32>
      %151 = vector.broadcast %149 : vector<128x1xf32> to vector<128x32xf32>
      %152 = arith.mulf %151, %150 : vector<128x32xf32>
      %153 = arith.addf %8, %152 : vector<128x32xf32>
      %c0_71 = arith.constant 0 : index
      %c0_72 = arith.constant 0 : index
      %154 = vector.load %arg22[%c0_71, %c0_72] : memref<128x32xf32, #tpu.memory_space<vmem>>, vector<128x32xf32>
      tpu.vector_store %arg22[%c0_71, %c0_72], %153 {strides = array<i32>} : memref<128x32xf32, #tpu.memory_space<vmem>>, vector<128x32xf32>,
    } else {
    }
    return
  }
  func.func @transform_0(%arg0: i32, %arg1: memref<1xi32, #tpu.memory_space<smem>>) -> (i32, i32) {
    %c0_i32 = arith.constant 0 : i32
    %c0_i32_0 = arith.constant 0 : i32
    return %arg0, %c0_i32 : i32, i32
  }
  func.func @transform_1(%arg0: i32, %arg1: memref<1xi32, #tpu.memory_space<smem>>) -> (i32, i32) {
    %c0_i32 = arith.constant 0 : i32
    %c0_i32_0 = arith.constant 0 : i32
    return %arg0, %c0_i32 : i32, i32
  }
  func.func @transform_2(%arg0: i32, %arg1: memref<1xi32, #tpu.memory_space<smem>>) -> (i32, i32) {
    %c0_i32 = arith.constant 0 : i32
    %c0_i32_0 = arith.constant 0 : i32
    return %arg0, %c0_i32 : i32, i32
  }
  func.func @transform_3(%arg0: i32, %arg1: memref<1xi32, #tpu.memory_space<smem>>) -> (i32, i32) {
    %c0_i32 = arith.constant 0 : i32
    %c0_i32_0 = arith.constant 0 : i32
    %c0_i32_1 = arith.constant 0 : i32
    return %c0_i32, %c0_i32_0 : i32, i32
  }
  func.func @transform_4(%arg0: i32, %arg1: memref<1xi32, #tpu.memory_space<smem>>) -> (i32, i32) {
    %c0_i32 = arith.constant 0 : i32
    %c0_i32_0 = arith.constant 0 : i32
    %c0_i32_1 = arith.constant 0 : i32
    return %c0_i32, %c0_i32_0 : i32, i32
  }
  func.func @transform_5(%arg0: i32, %arg1: memref<1xi32, #tpu.memory_space<smem>>) -> (i32, i32) {
    %c0_i32 = arith.constant 0 : i32
    %c0_i32_0 = arith.constant 0 : i32
    %c0_i32_1 = arith.constant 0 : i32
    return %c0_i32, %c0_i32_0 : i32, i32
  }
  func.func @transform_6(%arg0: i32, %arg1: memref<1xi32, #tpu.memory_space<smem>>) -> (i32, i32) {
    %c0_i32 = arith.constant 0 : i32
    %c0_i32_0 = arith.constant 0 : i32
    %c0_i32_1 = arith.constant 0 : i32
    return %c0_i32, %c0_i32_0 : i32, i32
  }
  func.func @transform_7(%arg0: i32, %arg1: memref<1xi32, #tpu.memory_space<smem>>) -> (i32, i32) {
    %c0_i32 = arith.constant 0 : i32
    %c0_i32_0 = arith.constant 0 : i32
    %c0_i32_1 = arith.constant 0 : i32
    return %c0_i32, %c0_i32_0 : i32, i32
  }
  func.func @transform_8(%arg0: i32, %arg1: memref<1xi32, #tpu.memory_space<smem>>) -> (i32, i32) {
    %c0_i32 = arith.constant 0 : i32
    %c0_i32_0 = arith.constant 0 : i32
    %c0_i32_1 = arith.constant 0 : i32
    return %c0_i32, %c0_i32_0 : i32, i32
  }
  func.func @transform_9(%arg0: i32, %arg1: memref<1xi32, #tpu.memory_space<smem>>) -> (i32, i32) {
    %c0_i32 = arith.constant 0 : i32
    %c0_i32_0 = arith.constant 0 : i32
    %c0_i32_1 = arith.constant 0 : i32
    return %c0_i32, %c0_i32_0 : i32, i32
  }
  func.func @transform_10(%arg0: i32, %arg1: memref<1xi32, #tpu.memory_space<smem>>) -> (i32, i32) {
    %c0_i32 = arith.constant 0 : i32
    %c0_i32_0 = arith.constant 0 : i32
    %c0_i32_1 = arith.constant 0 : i32
    return %c0_i32, %c0_i32_0 : i32, i32
  }
  func.func @transform_11(%arg0: i32, %arg1: memref<1xi32, #tpu.memory_space<smem>>) -> (i32, i32) {
    %c0_i32 = arith.constant 0 : i32
    %c0_i32_0 = arith.constant 0 : i32
    %c0_i32_1 = arith.constant 0 : i32
    return %c0_i32, %c0_i32_0 : i32, i32
  }
  func.func @transform_12(%arg0: i32, %arg1: memref<1xi32, #tpu.memory_space<smem>>) -> (i32, i32) {
    %c0_i32 = arith.constant 0 : i32
    %c0_i32_0 = arith.constant 0 : i32
    %c0_i32_1 = arith.constant 0 : i32
    return %c0_i32, %c0_i32_0 : i32, i32
  }
  func.func @transform_13(%arg0: i32, %arg1: memref<1xi32, #tpu.memory_space<smem>>) -> (i32, i32) {
    %c0_i32 = arith.constant 0 : i32
    %c0_i32_0 = arith.constant 0 : i32
    %c0_i32_1 = arith.constant 0 : i32
    return %c0_i32, %c0_i32_0 : i32, i32
  }
  func.func @transform_14(%arg0: i32, %arg1: memref<1xi32, #tpu.memory_space<smem>>) -> (i32, i32) {
    %c0_i32 = arith.constant 0 : i32
    %c0_i32_0 = arith.constant 0 : i32
    %c0_i32_1 = arith.constant 0 : i32
    return %c0_i32, %c0_i32_0 : i32, i32
  }
  func.func @transform_15(%arg0: i32, %arg1: memref<1xi32, #tpu.memory_space<smem>>) -> (i32, i32) {
    %c0_i32 = arith.constant 0 : i32
    %c0_i32_0 = arith.constant 0 : i32
    %c0_i32_1 = arith.constant 0 : i32
    return %c0_i32, %c0_i32_0 : i32, i32
  }
  func.func @transform_16(%arg0: i32, %arg1: memref<1xi32, #tpu.memory_space<smem>>) -> (i32, i32) {
    %c0_i32 = arith.constant 0 : i32
    %c0_i32_0 = arith.constant 0 : i32
    %c0_i32_1 = arith.constant 0 : i32
    return %c0_i32, %c0_i32_0 : i32, i32
  }
  func.func @transform_17(%arg0: i32, %arg1: memref<1xi32, #tpu.memory_space<smem>>) -> (i32, i32) {
    %c0_i32 = arith.constant 0 : i32
    %c0_i32_0 = arith.constant 0 : i32
    %c0_i32_1 = arith.constant 0 : i32
    return %c0_i32, %c0_i32_0 : i32, i32
  }
  func.func @transform_18(%arg0: i32, %arg1: memref<1xi32, #tpu.memory_space<smem>>) -> (i32, i32) {
    %c0_i32 = arith.constant 0 : i32
    %c0_i32_0 = arith.constant 0 : i32
    %c0_i32_1 = arith.constant 0 : i32
    return %c0_i32, %c0_i32_0 : i32, i32
  }
  func.func @transform_19(%arg0: i32, %arg1: memref<1xi32, #tpu.memory_space<smem>>) -> (i32, i32) {
    %c0_i32 = arith.constant 0 : i32
    %c0_i32_0 = arith.constant 0 : i32
    %c0_i32_1 = arith.constant 0 : i32
    return %c0_i32, %c0_i32_0 : i32, i32
  }
  func.func @transform_20(%arg0: i32, %arg1: memref<1xi32, #tpu.memory_space<smem>>) -> (i32, i32) {
    %c0_i32 = arith.constant 0 : i32
    %c0_i32_0 = arith.constant 0 : i32
    return %arg0, %c0_i32 : i32, i32
  }
}

</mosaic_0001>

<llo_original>
// kernel: face_postfuse.1
$region0: #{face_postfuse.1}
  #allocation0 [shape = 'u32[]', space=smem, size = 0x4, offset = 0x4, fixed_abs, tag = 'smem constant byte address 0x4 - core index']
  #allocation1 [shape = 'u32[144,128]{1,0:T(1,128)}', space=vmem, size = 0x12000, scoped, tag = 'internal scratch']
  #allocation2 [shape = 's32[1]{0}', space=sflag, size = 0x4, scoped, tag = 'scoped memory for face_postfuse.1']
  #allocation3 [shape = 's32[1]{0:T(128)S(6)}', space=smem, size = 0x200, scoped, tag = 'prefetched SMEM operand 0']
  %s0 = inlined_call_operand.<no memory space> [shape: s32[1], index: 0, kind: input, shape index: {}]
  %s1 = inlined_call_operand.vmem [shape: f32[128,32], index: 1, kind: input, shape index: {}]
  %s2 = inlined_call_operand.vmem [shape: f32[128,32], index: 2, kind: input, shape index: {}]
  %s3 = inlined_call_operand.vmem [shape: f32[128,1], index: 3, kind: input, shape index: {}]
  %s4 = inlined_call_operand.vmem [shape: f32[1,32], index: 4, kind: input, shape index: {}]
  %s5 = inlined_call_operand.vmem [shape: f32[1,32], index: 5, kind: input, shape index: {}]
  %s6 = inlined_call_operand.vmem [shape: f32[1,32], index: 6, kind: input, shape index: {}]
  %s7 = inlined_call_operand.vmem [shape: f32[1,32], index: 7, kind: input, shape index: {}]
  %s8 = inlined_call_operand.vmem [shape: bf16[32,32], index: 8, kind: input, shape index: {}]
  %s9 = inlined_call_operand.vmem [shape: bf16[32,32], index: 9, kind: input, shape index: {}]
  %s10 = inlined_call_operand.vmem [shape: f32[1,32], index: 10, kind: input, shape index: {}]
  %s11 = inlined_call_operand.vmem [shape: bf16[32,32], index: 11, kind: input, shape index: {}]
  %s12 = inlined_call_operand.vmem [shape: f32[1,32], index: 12, kind: input, shape index: {}]
  %s13 = inlined_call_operand.vmem [shape: f32[1,32], index: 13, kind: input, shape index: {}]
  %s14 = inlined_call_operand.vmem [shape: f32[1,32], index: 14, kind: input, shape index: {}]
  %s15 = inlined_call_operand.vmem [shape: bf16[32,32], index: 15, kind: input, shape index: {}]
  %s16 = inlined_call_operand.vmem [shape: f32[1,32], index: 16, kind: input, shape index: {}]
  %s17 = inlined_call_operand.vmem [shape: bf16[32,32], index: 17, kind: input, shape index: {}]
  %s18 = inlined_call_operand.vmem [shape: f32[1,32], index: 18, kind: input, shape index: {}]
  %s19 = inlined_call_operand.vmem [shape: f32[1,32], index: 19, kind: input, shape index: {}]
  %s20 = inlined_call_operand.vmem [shape: f32[1,32], index: 20, kind: input, shape index: {}]
  %s21 = inlined_call_operand.vmem [shape: f32[128,32], index: 21, kind: output, shape index: {}]
  %s22 = sld [smem:[#allocation0]]
  $region98: #{face_postfuse.1} parent=0
    _
  %s24 = ssub.s32 1, %s22
  %s25 = scalar_select 0, %s24, %s22
  %26 = sst [smem:[#allocation3]] %s0
  // Predicated region
  $region2: #{face_postfuse.1} parent=0 // pred_check
    _
  $region3: #{face_postfuse.1} parent=0 // pred_check_branch
    %28 = sbr.rel (0) target = $region5
  $region4: #{face_postfuse.1} parent=0 // pred_region
    _
  $region5: #{face_postfuse.1} parent=0 // pred_fallthru
    _
  // Predicated region
  $region6: #{face_postfuse.1} parent=0 // pred_check
    _
  $region7: #{face_postfuse.1} parent=0 // pred_check_branch
    %30 = sbr.rel (0) target = $region9
  $region8: #{face_postfuse.1} parent=0 // pred_region
    _
  $region9: #{face_postfuse.1} parent=0 // pred_fallthru
    _
  // Predicated region
  $region10: #{face_postfuse.1} parent=0 // pred_check
    _
  $region11: #{face_postfuse.1} parent=0 // pred_check_branch
    %32 = sbr.rel (0) target = $region13
  $region12: #{face_postfuse.1} parent=0 // pred_region
    _
  $region13: #{face_postfuse.1} parent=0 // pred_fallthru
    _
  // Predicated region
  $region14: #{face_postfuse.1} parent=0 // pred_check
    _
  $region15: #{face_postfuse.1} parent=0 // pred_check_branch
    %34 = sbr.rel (0) target = $region17
  $region16: #{face_postfuse.1} parent=0 // pred_region
    _
  $region17: #{face_postfuse.1} parent=0 // pred_fallthru
    _
  // Predicated region
  $region18: #{face_postfuse.1} parent=0 // pred_check
    _
  $region19: #{face_postfuse.1} parent=0 // pred_check_branch
    %36 = sbr.rel (0) target = $region21
  $region20: #{face_postfuse.1} parent=0 // pred_region
    _
  $region21: #{face_postfuse.1} parent=0 // pred_fallthru
    _
  // Predicated region
  $region22: #{face_postfuse.1} parent=0 // pred_check
    _
  $region23: #{face_postfuse.1} parent=0 // pred_check_branch
    %38 = sbr.rel (0) target = $region25
  $region24: #{face_postfuse.1} parent=0 // pred_region
    _
  $region25: #{face_postfuse.1} parent=0 // pred_fallthru
    _
  // Predicated region
  $region26: #{face_postfuse.1} parent=0 // pred_check
    _
  $region27: #{face_postfuse.1} parent=0 // pred_check_branch
    %40 = sbr.rel (0) target = $region29
  $region28: #{face_postfuse.1} parent=0 // pred_region
    _
  $region29: #{face_postfuse.1} parent=0 // pred_fallthru
    _
  // Predicated region
  $region30: #{face_postfuse.1} parent=0 // pred_check
    _
  $region31: #{face_postfuse.1} parent=0 // pred_check_branch
    %42 = sbr.rel (0) target = $region33
  $region32: #{face_postfuse.1} parent=0 // pred_region
    _
  $region33: #{face_postfuse.1} parent=0 // pred_fallthru
    _
  // Predicated region
  $region34: #{face_postfuse.1} parent=0 // pred_check
    _
  $region35: #{face_postfuse.1} parent=0 // pred_check_branch
    %44 = sbr.rel (0) target = $region37
  $region36: #{face_postfuse.1} parent=0 // pred_region
    _
  $region37: #{face_postfuse.1} parent=0 // pred_fallthru
    _
  // Predicated region
  $region38: #{face_postfuse.1} parent=0 // pred_check
    _
  $region39: #{face_postfuse.1} parent=0 // pred_check_branch
    %46 = sbr.rel (0) target = $region41
  $region40: #{face_postfuse.1} parent=0 // pred_region
    _
  $region41: #{face_postfuse.1} parent=0 // pred_fallthru
    _
  // Predicated region
  $region42: #{face_postfuse.1} parent=0 // pred_check
    _
  $region43: #{face_postfuse.1} parent=0 // pred_check_branch
    %48 = sbr.rel (0) target = $region45
  $region44: #{face_postfuse.1} parent=0 // pred_region
    _
  $region45: #{face_postfuse.1} parent=0 // pred_fallthru
    _
  // Predicated region
  $region46: #{face_postfuse.1} parent=0 // pred_check
    _
  $region47: #{face_postfuse.1} parent=0 // pred_check_branch
    %50 = sbr.rel (0) target = $region49
  $region48: #{face_postfuse.1} parent=0 // pred_region
    _
  $region49: #{face_postfuse.1} parent=0 // pred_fallthru
    _
  // Predicated region
  $region50: #{face_postfuse.1} parent=0 // pred_check
    _
  $region51: #{face_postfuse.1} parent=0 // pred_check_branch
    %52 = sbr.rel (0) target = $region53
  $region52: #{face_postfuse.1} parent=0 // pred_region
    _
  $region53: #{face_postfuse.1} parent=0 // pred_fallthru
    _
  // Predicated region
  $region54: #{face_postfuse.1} parent=0 // pred_check
    _
  $region55: #{face_postfuse.1} parent=0 // pred_check_branch
    %54 = sbr.rel (0) target = $region57
  $region56: #{face_postfuse.1} parent=0 // pred_region
    _
  $region57: #{face_postfuse.1} parent=0 // pred_fallthru
    _
  // Predicated region
  $region58: #{face_postfuse.1} parent=0 // pred_check
    _
  $region59: #{face_postfuse.1} parent=0 // pred_check_branch
    %56 = sbr.rel (0) target = $region61
  $region60: #{face_postfuse.1} parent=0 // pred_region
    _
  $region61: #{face_postfuse.1} parent=0 // pred_fallthru
    _
  // Predicated region
  $region62: #{face_postfuse.1} parent=0 // pred_check
    _
  $region63: #{face_postfuse.1} parent=0 // pred_check_branch
    %58 = sbr.rel (0) target = $region65
  $region64: #{face_postfuse.1} parent=0 // pred_region
    _
  $region65: #{face_postfuse.1} parent=0 // pred_fallthru
    _
  // Predicated region
  $region66: #{face_postfuse.1} parent=0 // pred_check
    _
  $region67: #{face_postfuse.1} parent=0 // pred_check_branch
    %60 = sbr.rel (0) target = $region69
  $region68: #{face_postfuse.1} parent=0 // pred_region
    _
  $region69: #{face_postfuse.1} parent=0 // pred_fallthru
    _
  // Predicated region
  $region70: #{face_postfuse.1} parent=0 // pred_check
    _
  $region71: #{face_postfuse.1} parent=0 // pred_check_branch
    %62 = sbr.rel (0) target = $region73
  $region72: #{face_postfuse.1} parent=0 // pred_region
    _
  $region73: #{face_postfuse.1} parent=0 // pred_fallthru
    _
  // Predicated region
  $region74: #{face_postfuse.1} parent=0 // pred_check
    _
  $region75: #{face_postfuse.1} parent=0 // pred_check_branch
    %64 = sbr.rel (0) target = $region77
  $region76: #{face_postfuse.1} parent=0 // pred_region
    _
  $region77: #{face_postfuse.1} parent=0 // pred_fallthru
    _
  // Predicated region
  $region78: #{face_postfuse.1} parent=0 // pred_check
    _
  $region79: #{face_postfuse.1} parent=0 // pred_check_branch
    %66 = sbr.rel (0) target = $region81
  $region80: #{face_postfuse.1} parent=0 // pred_region
    _
  $region81: #{face_postfuse.1} parent=0 // pred_fallthru
    _
  %s68 = sld [smem:[#allocation3]]
  %p69 = scmp.eq.s32.totalorder %s68, 0
  // Predicated region
  $region82: #{face_postfuse.1} parent=0 // pred_check
    %p70 = pneg %p69
  $region83: #{face_postfuse.1} parent=0 // pred_check_branch
    %72 = sbr.rel (%p70) target = $region85
  $region84: #{face_postfuse.1} parent=0 // pred_region
    %v73 = vld [vmem:[%s1] sm:$0xff]
    %v74 = vld [vmem:[%s1 + $0x8] sm:$0xff]
    %v75 = vld [vmem:[%s1 + $0x10] sm:$0xff]
    %v76 = vld [vmem:[%s1 + $0x18] sm:$0xff]
    %v77 = vld [vmem:[%s1 + $0x20] sm:$0xff]
    %v78 = vld [vmem:[%s1 + $0x28] sm:$0xff]
    %v79 = vld [vmem:[%s1 + $0x30] sm:$0xff]
    %v80 = vld [vmem:[%s1 + $0x38] sm:$0xff]
    %v81 = vld [vmem:[%s1 + $0x40] sm:$0xff]
    %v82 = vld [vmem:[%s1 + $0x48] sm:$0xff]
    %v83 = vld [vmem:[%s1 + $0x50] sm:$0xff]
    %v84 = vld [vmem:[%s1 + $0x58] sm:$0xff]
    %v85 = vld [vmem:[%s1 + $0x60] sm:$0xff]
    %v86 = vld [vmem:[%s1 + $0x68] sm:$0xff]
    %v87 = vld [vmem:[%s1 + $0x70] sm:$0xff]
    %v88 = vld [vmem:[%s1 + $0x78] sm:$0xff]
    %vm89 = vcmask 261120
    %90 = vst.msk [vmem:[%s21] sm:$0xff] %vm89, %v73
    %91 = vst.msk [vmem:[%s21 + $0x8] sm:$0xff] %vm89, %v74
    %92 = vst.msk [vmem:[%s21 + $0x10] sm:$0xff] %vm89, %v75
    %93 = vst.msk [vmem:[%s21 + $0x18] sm:$0xff] %vm89, %v76
    %94 = vst.msk [vmem:[%s21 + $0x20] sm:$0xff] %vm89, %v77
    %95 = vst.msk [vmem:[%s21 + $0x28] sm:$0xff] %vm89, %v78
    %96 = vst.msk [vmem:[%s21 + $0x30] sm:$0xff] %vm89, %v79
    %97 = vst.msk [vmem:[%s21 + $0x38] sm:$0xff] %vm89, %v80
    %98 = vst.msk [vmem:[%s21 + $0x40] sm:$0xff] %vm89, %v81
    %99 = vst.msk [vmem:[%s21 + $0x48] sm:$0xff] %vm89, %v82
    %100 = vst.msk [vmem:[%s21 + $0x50] sm:$0xff] %vm89, %v83
    %101 = vst.msk [vmem:[%s21 + $0x58] sm:$0xff] %vm89, %v84
    %102 = vst.msk [vmem:[%s21 + $0x60] sm:$0xff] %vm89, %v85
    %103 = vst.msk [vmem:[%s21 + $0x68] sm:$0xff] %vm89, %v86
    %104 = vst.msk [vmem:[%s21 + $0x70] sm:$0xff] %vm89, %v87
    %105 = vst.msk [vmem:[%s21 + $0x78] sm:$0xff] %vm89, %v88
  $region85: #{face_postfuse.1} parent=0 // pred_fallthru
    _
  %p106 = scmp.ne.s32.totalorder %s68, 0
  // Predicated region
  $region86: #{face_postfuse.1} parent=0 // pred_check
    %p107 = pneg %p106
  $region87: #{face_postfuse.1} parent=0 // pred_check_branch
    %109 = sbr.rel (%p107) target = $region89
  $region88: #{face_postfuse.1} parent=0 // pred_region
    %v110 = vld [vmem:[%s1] sm:$0xff]
    %v111 = vld [vmem:[%s1 + $0x8] sm:$0xff]
    %v112 = vld [vmem:[%s1 + $0x10] sm:$0xff]
    %v113 = vld [vmem:[%s1 + $0x18] sm:$0xff]
    %v114 = vld [vmem:[%s1 + $0x20] sm:$0xff]
    %v115 = vld [vmem:[%s1 + $0x28] sm:$0xff]
    %v116 = vld [vmem:[%s1 + $0x30] sm:$0xff]
    %v117 = vld [vmem:[%s1 + $0x38] sm:$0xff]
    %v118 = vld [vmem:[%s1 + $0x40] sm:$0xff]
    %v119 = vld [vmem:[%s1 + $0x48] sm:$0xff]
    %v120 = vld [vmem:[%s1 + $0x50] sm:$0xff]
    %v121 = vld [vmem:[%s1 + $0x58] sm:$0xff]
    %v122 = vld [vmem:[%s1 + $0x60] sm:$0xff]
    %v123 = vld [vmem:[%s1 + $0x68] sm:$0xff]
    %v124 = vld [vmem:[%s1 + $0x70] sm:$0xff]
    %v125 = vld [vmem:[%s1 + $0x78] sm:$0xff]
    %v126 = vld [vmem:[%s2] sm:$0xff]
    %v127 = vld [vmem:[%s2 + $0x8] sm:$0xff]
    %v128 = vld [vmem:[%s2 + $0x10] sm:$0xff]
    %v129 = vld [vmem:[%s2 + $0x18] sm:$0xff]
    %v130 = vld [vmem:[%s2 + $0x20] sm:$0xff]
    %v131 = vld [vmem:[%s2 + $0x28] sm:$0xff]
    %v132 = vld [vmem:[%s2 + $0x30] sm:$0xff]
    %v133 = vld [vmem:[%s2 + $0x38] sm:$0xff]
    %v134 = vld [vmem:[%s2 + $0x40] sm:$0xff]
    %v135 = vld [vmem:[%s2 + $0x48] sm:$0xff]
    %v136 = vld [vmem:[%s2 + $0x50] sm:$0xff]
    %v137 = vld [vmem:[%s2 + $0x58] sm:$0xff]
    %v138 = vld [vmem:[%s2 + $0x60] sm:$0xff]
    %v139 = vld [vmem:[%s2 + $0x68] sm:$0xff]
    %v140 = vld [vmem:[%s2 + $0x70] sm:$0xff]
    %v141 = vld [vmem:[%s2 + $0x78] sm:$0xff]
    %vm142 = vcmask 261120
    %v143 = vsel %vm142, %v110, 0.0
    %144 = vadd.xlane.f32.xlu0 %v143
    %v145 = vpop.xlane.xlu0 %144
    %v146 = vsel %vm142, %v111, 0.0
    %147 = vadd.xlane.f32.xlu0 %v146
    %v148 = vpop.xlane.xlu0 %147
    %v149 = vsel %vm142, %v112, 0.0
    %150 = vadd.xlane.f32.xlu0 %v149
    %v151 = vpop.xlane.xlu0 %150
    %v152 = vsel %vm142, %v113, 0.0
    %153 = vadd.xlane.f32.xlu0 %v152
    %v154 = vpop.xlane.xlu0 %153
    %v155 = vsel %vm142, %v114, 0.0
    %156 = vadd.xlane.f32.xlu0 %v155
    %v157 = vpop.xlane.xlu0 %156
    %v158 = vsel %vm142, %v115, 0.0
    %159 = vadd.xlane.f32.xlu0 %v158
    %v160 = vpop.xlane.xlu0 %159
    %v161 = vsel %vm142, %v116, 0.0
    %162 = vadd.xlane.f32.xlu0 %v161
    %v163 = vpop.xlane.xlu0 %162
    %v164 = vsel %vm142, %v117, 0.0
    %165 = vadd.xlane.f32.xlu0 %v164
    %v166 = vpop.xlane.xlu0 %165
    %v167 = vsel %vm142, %v118, 0.0
    %168 = vadd.xlane.f32.xlu0 %v167
    %v169 = vpop.xlane.xlu0 %168
    %v170 = vsel %vm142, %v119, 0.0
    %171 = vadd.xlane.f32.xlu0 %v170
    %v172 = vpop.xlane.xlu0 %171
    %v173 = vsel %vm142, %v120, 0.0
    %174 = vadd.xlane.f32.xlu0 %v173
    %v175 = vpop.xlane.xlu0 %174
    %v176 = vsel %vm142, %v121, 0.0
    %177 = vadd.xlane.f32.xlu0 %v176
    %v178 = vpop.xlane.xlu0 %177
    %v179 = vsel %vm142, %v122, 0.0
    %180 = vadd.xlane.f32.xlu0 %v179
    %v181 = vpop.xlane.xlu0 %180
    %v182 = vsel %vm142, %v123, 0.0
    %183 = vadd.xlane.f32.xlu0 %v182
    %v184 = vpop.xlane.xlu0 %183
    %v185 = vsel %vm142, %v124, 0.0
    %186 = vadd.xlane.f32.xlu0 %v185
    %v187 = vpop.xlane.xlu0 %186
    %v188 = vsel %vm142, %v125, 0.0
    %189 = vadd.xlane.f32.xlu0 %v188
    %v190 = vpop.xlane.xlu0 %189
    %v191 = vsel %vm142, %v126, 0.0
    %192 = vadd.xlane.f32.xlu0 %v191
    %v193 = vpop.xlane.xlu0 %192
    %v194 = vsel %vm142, %v127, 0.0
    %195 = vadd.xlane.f32.xlu0 %v194
    %v196 = vpop.xlane.xlu0 %195
    %v197 = vsel %vm142, %v128, 0.0
    %198 = vadd.xlane.f32.xlu0 %v197
    %v199 = vpop.xlane.xlu0 %198
    %v200 = vsel %vm142, %v129, 0.0
    %201 = vadd.xlane.f32.xlu0 %v200
    %v202 = vpop.xlane.xlu0 %201
    %v203 = vsel %vm142, %v130, 0.0
    %204 = vadd.xlane.f32.xlu0 %v203
    %v205 = vpop.xlane.xlu0 %204
    %v206 = vsel %vm142, %v131, 0.0
    %207 = vadd.xlane.f32.xlu0 %v206
    %v208 = vpop.xlane.xlu0 %207
    %v209 = vsel %vm142, %v132, 0.0
    %210 = vadd.xlane.f32.xlu0 %v209
    %v211 = vpop.xlane.xlu0 %210
    %v212 = vsel %vm142, %v133, 0.0
    %213 = vadd.xlane.f32.xlu0 %v212
    %v214 = vpop.xlane.xlu0 %213
    %v215 = vsel %vm142, %v134, 0.0
    %216 = vadd.xlane.f32.xlu0 %v215
    %v217 = vpop.xlane.xlu0 %216
    %v218 = vsel %vm142, %v135, 0.0
    %219 = vadd.xlane.f32.xlu0 %v218
    %v220 = vpop.xlane.xlu0 %219
    %v221 = vsel %vm142, %v136, 0.0
    %222 = vadd.xlane.f32.xlu0 %v221
    %v223 = vpop.xlane.xlu0 %222
    %v224 = vsel %vm142, %v137, 0.0
    %225 = vadd.xlane.f32.xlu0 %v224
    %v226 = vpop.xlane.xlu0 %225
    %v227 = vsel %vm142, %v138, 0.0
    %228 = vadd.xlane.f32.xlu0 %v227
    %v229 = vpop.xlane.xlu0 %228
    %v230 = vsel %vm142, %v139, 0.0
    %231 = vadd.xlane.f32.xlu0 %v230
    %v232 = vpop.xlane.xlu0 %231
    %v233 = vsel %vm142, %v140, 0.0
    %234 = vadd.xlane.f32.xlu0 %v233
    %v235 = vpop.xlane.xlu0 %234
    %v236 = vsel %vm142, %v141, 0.0
    %237 = vadd.xlane.f32.xlu0 %v236
    %v238 = vpop.xlane.xlu0 %237
    %v239 = vadd.f32 %v145, %v193
    %v240 = vadd.f32 %v148, %v196
    %v241 = vadd.f32 %v151, %v199
    %v242 = vadd.f32 %v154, %v202
    %v243 = vadd.f32 %v157, %v205
    %v244 = vadd.f32 %v160, %v208
    %v245 = vadd.f32 %v163, %v211
    %v246 = vadd.f32 %v166, %v214
    %v247 = vadd.f32 %v169, %v217
    %v248 = vadd.f32 %v172, %v220
    %v249 = vadd.f32 %v175, %v223
    %v250 = vadd.f32 %v178, %v226
    %v251 = vadd.f32 %v181, %v229
    %v252 = vadd.f32 %v184, %v232
    %v253 = vadd.f32 %v187, %v235
    %v254 = vadd.f32 %v190, %v238
    %v255 = vrcp.pop 64.0
    %v256 = vmul.f32 %v239, %v255
    %v257 = vmul.f32 %v240, %v255
    %v258 = vmul.f32 %v241, %v255
    %v259 = vmul.f32 %v242, %v255
    %v260 = vmul.f32 %v243, %v255
    %v261 = vmul.f32 %v244, %v255
    %v262 = vmul.f32 %v245, %v255
    %v263 = vmul.f32 %v246, %v255
    %v264 = vmul.f32 %v247, %v255
    %v265 = vmul.f32 %v248, %v255
    %v266 = vmul.f32 %v249, %v255
    %v267 = vmul.f32 %v250, %v255
    %v268 = vmul.f32 %v251, %v255
    %v269 = vmul.f32 %v252, %v255
    %v270 = vmul.f32 %v253, %v255
    %v271 = vmul.f32 %v254, %v255
    %v272 = vsub.f32 %v110, %v256
    %v273 = vsub.f32 %v111, %v257
    %v274 = vsub.f32 %v112, %v258
    %v275 = vsub.f32 %v113, %v259
    %v276 = vsub.f32 %v114, %v260
    %v277 = vsub.f32 %v115, %v261
    %v278 = vsub.f32 %v116, %v262
    %v279 = vsub.f32 %v117, %v263
    %v280 = vsub.f32 %v118, %v264
    %v281 = vsub.f32 %v119, %v265
    %v282 = vsub.f32 %v120, %v266
    %v283 = vsub.f32 %v121, %v267
    %v284 = vsub.f32 %v122, %v268
    %v285 = vsub.f32 %v123, %v269
    %v286 = vsub.f32 %v124, %v270
    %v287 = vsub.f32 %v125, %v271
    %v288 = vsub.f32 %v126, %v256
    %v289 = vsub.f32 %v127, %v257
    %v290 = vsub.f32 %v128, %v258
    %v291 = vsub.f32 %v129, %v259
    %v292 = vsub.f32 %v130, %v260
    %v293 = vsub.f32 %v131, %v261
    %v294 = vsub.f32 %v132, %v262
    %v295 = vsub.f32 %v133, %v263
    %v296 = vsub.f32 %v134, %v264
    %v297 = vsub.f32 %v135, %v265
    %v298 = vsub.f32 %v136, %v266
    %v299 = vsub.f32 %v137, %v267
    %v300 = vsub.f32 %v138, %v268
    %v301 = vsub.f32 %v139, %v269
    %v302 = vsub.f32 %v140, %v270
    %v303 = vsub.f32 %v141, %v271
    %v304 = vmul.f32 %v272, %v272
    %v305 = vmul.f32 %v273, %v273
    %v306 = vmul.f32 %v274, %v274
    %v307 = vmul.f32 %v275, %v275
    %v308 = vmul.f32 %v276, %v276
    %v309 = vmul.f32 %v277, %v277
    %v310 = vmul.f32 %v278, %v278
    %v311 = vmul.f32 %v279, %v279
    %v312 = vmul.f32 %v280, %v280
    %v313 = vmul.f32 %v281, %v281
    %v314 = vmul.f32 %v282, %v282
    %v315 = vmul.f32 %v283, %v283
    %v316 = vmul.f32 %v284, %v284
    %v317 = vmul.f32 %v285, %v285
    %v318 = vmul.f32 %v286, %v286
    %v319 = vmul.f32 %v287, %v287
    %v320 = vsel %vm142, %v304, 0.0
    %321 = vadd.xlane.f32.xlu0 %v320
    %v322 = vpop.xlane.xlu0 %321
    %v323 = vsel %vm142, %v305, 0.0
    %324 = vadd.xlane.f32.xlu0 %v323
    %v325 = vpop.xlane.xlu0 %324
    %v326 = vsel %vm142, %v306, 0.0
    %327 = vadd.xlane.f32.xlu0 %v326
    %v328 = vpop.xlane.xlu0 %327
    %v329 = vsel %vm142, %v307, 0.0
    %330 = vadd.xlane.f32.xlu0 %v329
    %v331 = vpop.xlane.xlu0 %330
    %v332 = vsel %vm142, %v308, 0.0
    %333 = vadd.xlane.f32.xlu0 %v332
    %v334 = vpop.xlane.xlu0 %333
    %v335 = vsel %vm142, %v309, 0.0
    %336 = vadd.xlane.f32.xlu0 %v335
    %v337 = vpop.xlane.xlu0 %336
    %v338 = vsel %vm142, %v310, 0.0
    %339 = vadd.xlane.f32.xlu0 %v338
    %v340 = vpop.xlane.xlu0 %339
    %v341 = vsel %vm142, %v311, 0.0
    %342 = vadd.xlane.f32.xlu0 %v341
    %v343 = vpop.xlane.xlu0 %342
    %v344 = vsel %vm142, %v312, 0.0
    %345 = vadd.xlane.f32.xlu0 %v344
    %v346 = vpop.xlane.xlu0 %345
    %v347 = vsel %vm142, %v313, 0.0
    %348 = vadd.xlane.f32.xlu0 %v347
    %v349 = vpop.xlane.xlu0 %348
    %v350 = vsel %vm142, %v314, 0.0
    %351 = vadd.xlane.f32.xlu0 %v350
    %v352 = vpop.xlane.xlu0 %351
    %v353 = vsel %vm142, %v315, 0.0
    %354 = vadd.xlane.f32.xlu0 %v353
    %v355 = vpop.xlane.xlu0 %354
    %v356 = vsel %vm142, %v316, 0.0
    %357 = vadd.xlane.f32.xlu0 %v356
    %v358 = vpop.xlane.xlu0 %357
    %v359 = vsel %vm142, %v317, 0.0
    %360 = vadd.xlane.f32.xlu0 %v359
    %v361 = vpop.xlane.xlu0 %360
    %v362 = vsel %vm142, %v318, 0.0
    %363 = vadd.xlane.f32.xlu0 %v362
    %v364 = vpop.xlane.xlu0 %363
    %v365 = vsel %vm142, %v319, 0.0
    %366 = vadd.xlane.f32.xlu0 %v365
    %v367 = vpop.xlane.xlu0 %366
    %v368 = vmul.f32 %v288, %v288
    %v369 = vmul.f32 %v289, %v289
    %v370 = vmul.f32 %v290, %v290
    %v371 = vmul.f32 %v291, %v291
    %v372 = vmul.f32 %v292, %v292
    %v373 = vmul.f32 %v293, %v293
    %v374 = vmul.f32 %v294, %v294
    %v375 = vmul.f32 %v295, %v295
    %v376 = vmul.f32 %v296, %v296
    %v377 = vmul.f32 %v297, %v297
    %v378 = vmul.f32 %v298, %v298
    %v379 = vmul.f32 %v299, %v299
    %v380 = vmul.f32 %v300, %v300
    %v381 = vmul.f32 %v301, %v301
    %v382 = vmul.f32 %v302, %v302
    %v383 = vmul.f32 %v303, %v303
    %v384 = vsel %vm142, %v368, 0.0
    %385 = vadd.xlane.f32.xlu0 %v384
    %v386 = vpop.xlane.xlu0 %385
    %v387 = vsel %vm142, %v369, 0.0
    %388 = vadd.xlane.f32.xlu0 %v387
    %v389 = vpop.xlane.xlu0 %388
    %v390 = vsel %vm142, %v370, 0.0
    %391 = vadd.xlane.f32.xlu0 %v390
    %v392 = vpop.xlane.xlu0 %391
    %v393 = vsel %vm142, %v371, 0.0
    %394 = vadd.xlane.f32.xlu0 %v393
    %v395 = vpop.xlane.xlu0 %394
    %v396 = vsel %vm142, %v372, 0.0
    %397 = vadd.xlane.f32.xlu0 %v396
    %v398 = vpop.xlane.xlu0 %397
    %v399 = vsel %vm142, %v373, 0.0
    %400 = vadd.xlane.f32.xlu0 %v399
    %v401 = vpop.xlane.xlu0 %400
    %v402 = vsel %vm142, %v374, 0.0
    %403 = vadd.xlane.f32.xlu0 %v402
    %v404 = vpop.xlane.xlu0 %403
    %v405 = vsel %vm142, %v375, 0.0
    %406 = vadd.xlane.f32.xlu0 %v405
    %v407 = vpop.xlane.xlu0 %406
    %v408 = vsel %vm142, %v376, 0.0
    %409 = vadd.xlane.f32.xlu0 %v408
    %v410 = vpop.xlane.xlu0 %409
    %v411 = vsel %vm142, %v377, 0.0
    %412 = vadd.xlane.f32.xlu0 %v411
    %v413 = vpop.xlane.xlu0 %412
    %v414 = vsel %vm142, %v378, 0.0
    %415 = vadd.xlane.f32.xlu0 %v414
    %v416 = vpop.xlane.xlu0 %415
    %v417 = vsel %vm142, %v379, 0.0
    %418 = vadd.xlane.f32.xlu0 %v417
    %v419 = vpop.xlane.xlu0 %418
    %v420 = vsel %vm142, %v380, 0.0
    %421 = vadd.xlane.f32.xlu0 %v420
    %v422 = vpop.xlane.xlu0 %421
    %v423 = vsel %vm142, %v381, 0.0
    %424 = vadd.xlane.f32.xlu0 %v423
    %v425 = vpop.xlane.xlu0 %424
    %v426 = vsel %vm142, %v382, 0.0
    %427 = vadd.xlane.f32.xlu0 %v426
    %v428 = vpop.xlane.xlu0 %427
    %v429 = vsel %vm142, %v383, 0.0
    %430 = vadd.xlane.f32.xlu0 %v429
    %v431 = vpop.xlane.xlu0 %430
    %v432 = vadd.f32 %v322, %v386
    %v433 = vadd.f32 %v325, %v389
    %v434 = vadd.f32 %v328, %v392
    %v435 = vadd.f32 %v331, %v395
    %v436 = vadd.f32 %v334, %v398
    %v437 = vadd.f32 %v337, %v401
    %v438 = vadd.f32 %v340, %v404
    %v439 = vadd.f32 %v343, %v407
    %v440 = vadd.f32 %v346, %v410
    %v441 = vadd.f32 %v349, %v413
    %v442 = vadd.f32 %v352, %v416
    %v443 = vadd.f32 %v355, %v419
    %v444 = vadd.f32 %v358, %v422
    %v445 = vadd.f32 %v361, %v425
    %v446 = vadd.f32 %v364, %v428
    %v447 = vadd.f32 %v367, %v431
    %v448 = vmul.f32 %v432, %v255
    %v449 = vmul.f32 %v433, %v255
    %v450 = vmul.f32 %v434, %v255
    %v451 = vmul.f32 %v435, %v255
    %v452 = vmul.f32 %v436, %v255
    %v453 = vmul.f32 %v437, %v255
    %v454 = vmul.f32 %v438, %v255
    %v455 = vmul.f32 %v439, %v255
    %v456 = vmul.f32 %v440, %v255
    %v457 = vmul.f32 %v441, %v255
    %v458 = vmul.f32 %v442, %v255
    %v459 = vmul.f32 %v443, %v255
    %v460 = vmul.f32 %v444, %v255
    %v461 = vmul.f32 %v445, %v255
    %v462 = vmul.f32 %v446, %v255
    %v463 = vmul.f32 %v447, %v255
    %v464 = vadd.f32 %v448, 1e-05
    %v465 = vadd.f32 %v449, 1e-05
    %v466 = vadd.f32 %v450, 1e-05
    %v467 = vadd.f32 %v451, 1e-05
    %v468 = vadd.f32 %v452, 1e-05
    %v469 = vadd.f32 %v453, 1e-05
    %v470 = vadd.f32 %v454, 1e-05
    %v471 = vadd.f32 %v455, 1e-05
    %v472 = vadd.f32 %v456, 1e-05
    %v473 = vadd.f32 %v457, 1e-05
    %v474 = vadd.f32 %v458, 1e-05
    %v475 = vadd.f32 %v459, 1e-05
    %v476 = vadd.f32 %v460, 1e-05
    %v477 = vadd.f32 %v461, 1e-05
    %v478 = vadd.f32 %v462, 1e-05
    %v479 = vadd.f32 %v463, 1e-05
    %v480 = vrsqrt.pop %v464
    %v481 = vrsqrt.pop %v465
    %v482 = vrsqrt.pop %v466
    %v483 = vrsqrt.pop %v467
    %v484 = vrsqrt.pop %v468
    %v485 = vrsqrt.pop %v469
    %v486 = vrsqrt.pop %v470
    %v487 = vrsqrt.pop %v471
    %v488 = vrsqrt.pop %v472
    %v489 = vrsqrt.pop %v473
    %v490 = vrsqrt.pop %v474
    %v491 = vrsqrt.pop %v475
    %v492 = vrsqrt.pop %v476
    %v493 = vrsqrt.pop %v477
    %v494 = vrsqrt.pop %v478
    %v495 = vrsqrt.pop %v479
    %v496 = vmul.f32 %v272, %v480
    %v497 = vmul.f32 %v273, %v481
    %v498 = vmul.f32 %v274, %v482
    %v499 = vmul.f32 %v275, %v483
    %v500 = vmul.f32 %v276, %v484
    %v501 = vmul.f32 %v277, %v485
    %v502 = vmul.f32 %v278, %v486
    %v503 = vmul.f32 %v279, %v487
    %v504 = vmul.f32 %v280, %v488
    %v505 = vmul.f32 %v281, %v489
    %v506 = vmul.f32 %v282, %v490
    %v507 = vmul.f32 %v283, %v491
    %v508 = vmul.f32 %v284, %v492
    %v509 = vmul.f32 %v285, %v493
    %v510 = vmul.f32 %v286, %v494
    %v511 = vmul.f32 %v287, %v495
    %v512 = vld [vmem:[%s4] sm:$0x1]
    %v514 = vlaneseq
    %v515 = vshrl.u32 %v514, 7
    %v516 = vsub.s32 0, %v515
    %v517 = vrot.slane %v512, %v516
    %v519 = vmul.f32 %v496, %v517
    %v520 = vmul.f32 %v497, %v517
    %v521 = vmul.f32 %v498, %v517
    %v522 = vmul.f32 %v499, %v517
    %v523 = vmul.f32 %v500, %v517
    %v524 = vmul.f32 %v501, %v517
    %v525 = vmul.f32 %v502, %v517
    %v526 = vmul.f32 %v503, %v517
    %v527 = vmul.f32 %v504, %v517
    %v528 = vmul.f32 %v505, %v517
    %v529 = vmul.f32 %v506, %v517
    %v530 = vmul.f32 %v507, %v517
    %v531 = vmul.f32 %v508, %v517
    %v532 = vmul.f32 %v509, %v517
    %v533 = vmul.f32 %v510, %v517
    %v534 = vmul.f32 %v511, %v517
    %v535 = vld [vmem:[%s5] sm:$0x1]
    %v537 = vlaneseq
    %v538 = vshrl.u32 %v537, 7
    %v539 = vsub.s32 0, %v538
    %v540 = vrot.slane %v535, %v539
    %v542 = vadd.f32 %v519, %v540
    %v543 = vadd.f32 %v520, %v540
    %v544 = vadd.f32 %v521, %v540
    %v545 = vadd.f32 %v522, %v540
    %v546 = vadd.f32 %v523, %v540
    %v547 = vadd.f32 %v524, %v540
    %v548 = vadd.f32 %v525, %v540
    %v549 = vadd.f32 %v526, %v540
    %v550 = vadd.f32 %v527, %v540
    %v551 = vadd.f32 %v528, %v540
    %v552 = vadd.f32 %v529, %v540
    %v553 = vadd.f32 %v530, %v540
    %v554 = vadd.f32 %v531, %v540
    %v555 = vadd.f32 %v532, %v540
    %v556 = vadd.f32 %v533, %v540
    %v557 = vadd.f32 %v534, %v540
    %v558 = vmul.f32 %v288, %v480
    %v559 = vmul.f32 %v289, %v481
    %v560 = vmul.f32 %v290, %v482
    %v561 = vmul.f32 %v291, %v483
    %v562 = vmul.f32 %v292, %v484
    %v563 = vmul.f32 %v293, %v485
    %v564 = vmul.f32 %v294, %v486
    %v565 = vmul.f32 %v295, %v487
    %v566 = vmul.f32 %v296, %v488
    %v567 = vmul.f32 %v297, %v489
    %v568 = vmul.f32 %v298, %v490
    %v569 = vmul.f32 %v299, %v491
    %v570 = vmul.f32 %v300, %v492
    %v571 = vmul.f32 %v301, %v493
    %v572 = vmul.f32 %v302, %v494
    %v573 = vmul.f32 %v303, %v495
    %v574 = vld [vmem:[%s6] sm:$0x1]
    %v576 = vlaneseq
    %v577 = vshrl.u32 %v576, 7
    %v578 = vsub.s32 0, %v577
    %v579 = vrot.slane %v574, %v578
    %v581 = vmul.f32 %v558, %v579
    %v582 = vmul.f32 %v559, %v579
    %v583 = vmul.f32 %v560, %v579
    %v584 = vmul.f32 %v561, %v579
    %v585 = vmul.f32 %v562, %v579
    %v586 = vmul.f32 %v563, %v579
    %v587 = vmul.f32 %v564, %v579
    %v588 = vmul.f32 %v565, %v579
    %v589 = vmul.f32 %v566, %v579
    %v590 = vmul.f32 %v567, %v579
    %v591 = vmul.f32 %v568, %v579
    %v592 = vmul.f32 %v569, %v579
    %v593 = vmul.f32 %v570, %v579
    %v594 = vmul.f32 %v571, %v579
    %v595 = vmul.f32 %v572, %v579
    %v596 = vmul.f32 %v573, %v579
    %v597 = vld [vmem:[%s7] sm:$0x1]
    %v599 = vlaneseq
    %v600 = vshrl.u32 %v599, 7
    %v601 = vsub.s32 0, %v600
    %v602 = vrot.slane %v597, %v601
    %v604 = vadd.f32 %v581, %v602
    %v605 = vadd.f32 %v582, %v602
    %v606 = vadd.f32 %v583, %v602
    %v607 = vadd.f32 %v584, %v602
    %v608 = vadd.f32 %v585, %v602
    %v609 = vadd.f32 %v586, %v602
    %v610 = vadd.f32 %v587, %v602
    %v611 = vadd.f32 %v588, %v602
    %v612 = vadd.f32 %v589, %v602
    %v613 = vadd.f32 %v590, %v602
    %v614 = vadd.f32 %v591, %v602
    %v615 = vadd.f32 %v592, %v602
    %v616 = vadd.f32 %v593, %v602
    %v617 = vadd.f32 %v594, %v602
    %v618 = vadd.f32 %v595, %v602
    %v619 = vadd.f32 %v596, %v602
    %v620 = vpack.c.bf16 %v543, %v542
    %v621 = vpack.c.bf16 %v545, %v544
    %v622 = vpack.c.bf16 %v547, %v546
    %v623 = vpack.c.bf16 %v549, %v548
    %v624 = vpack.c.bf16 %v551, %v550
    %v625 = vpack.c.bf16 %v553, %v552
    %v626 = vpack.c.bf16 %v555, %v554
    %v627 = vpack.c.bf16 %v557, %v556
    %v628 = vld [vmem:[%s8] sm:$0xf]
    %v629 = vld [vmem:[%s8 + $0x4] sm:$0xf]
    %v630 = vld [vmem:[%s8 + $0x8] sm:$0xf]
    %v631 = vld [vmem:[%s8 + $0xc] sm:$0xf]
    %v632 = vpack.c.bf16 %v605, %v604
    %v633 = vpack.c.bf16 %v607, %v606
    %v634 = vpack.c.bf16 %v609, %v608
    %v635 = vpack.c.bf16 %v611, %v610
    %v636 = vpack.c.bf16 %v613, %v612
    %v637 = vpack.c.bf16 %v615, %v614
    %v638 = vpack.c.bf16 %v617, %v616
    %v639 = vpack.c.bf16 %v619, %v618
    %v640 = vld [vmem:[%s9] sm:$0xf]
    %v641 = vld [vmem:[%s9 + $0x4] sm:$0xf]
    %v642 = vld [vmem:[%s9 + $0x8] sm:$0xf]
    %v643 = vld [vmem:[%s9 + $0xc] sm:$0xf]
    %v648 = vunpack.c.l.b16 %v640
    %v649 = vunpack.c.l.b16 %v641
    %v650 = vunpack.c.l.b16 %v642
    %v651 = vunpack.c.l.b16 %v643
    %v652 = vpack.c.b16 %v649, %v648
    %v653 = vpack.c.b16 %v651, %v650
    %v657 = vsel %vm142, %v632, 0
    %v660 = vsel %vm142, %v633, 0
    %v663 = vsel %vm142, %v634, 0
    %v666 = vsel %vm142, %v635, 0
    %v669 = vsel %vm142, %v636, 0
    %v672 = vsel %vm142, %v637, 0
    %v675 = vsel %vm142, %v638, 0
    %v678 = vsel %vm142, %v639, 0
    %680 = vmatprep.subr.bf16.mxu0 0
    %681 = vmatpush1.bf16.msra.mxu0 %v652
    %682 = vmatprep.subr.bf16.mxu0 0
    %683 = vmatpush1.bf16.msra.mxu0 %v653
    %684 = vmatprep.subr.bf16.mxu0 0
    %685 = vmatpush1.bf16.msra.mxu0 0
    %686 = vmatprep.subr.bf16.mxu0 0
    %687 = vmatpush1.bf16.msra.mxu0 0
    %688 = vmatprep.subr.bf16.mxu0 0
    %689 = vmatpush1.bf16.msra.mxu0 0
    %690 = vmatprep.subr.bf16.mxu0 0
    %691 = vmatpush1.bf16.msra.mxu0 0
    %692 = vmatprep.subr.bf16.mxu0 0
    %693 = vmatpush1.bf16.msra.mxu0 0
    %694 = vmatprep.subr.bf16.mxu0 0
    %695 = vmatpush1.bf16.msra.mxu0 0
    %696 = vmatprep.subr.bf16.mxu0 0
    %697 = vmatpush1.bf16.msra.mxu0 0
    %698 = vmatprep.subr.bf16.mxu0 0
    %699 = vmatpush1.bf16.msra.mxu0 0
    %700 = vmatprep.subr.bf16.mxu0 0
    %701 = vmatpush1.bf16.msra.mxu0 0
    %702 = vmatprep.subr.bf16.mxu0 0
    %703 = vmatpush1.bf16.msra.mxu0 0
    %704 = vmatprep.subr.bf16.mxu0 0
    %705 = vmatpush1.bf16.msra.mxu0 0
    %706 = vmatprep.subr.bf16.mxu0 0
    %707 = vmatpush1.bf16.msra.mxu0 0
    %708 = vmatprep.subr.bf16.mxu0 0
    %709 = vmatpush1.bf16.msra.mxu0 0
    %710 = vmatprep.subr.bf16.mxu0 0
    %711 = vmatpush1.bf16.msra.mxu0 0
    %712 = vmatprep.mubr.bf16.mxu0 0
    %713 = vmatmul.mubr.bf16.gmra.mrb[0].mxu0 %v657
    %v714 = vpop.f32.mrb[0].mxu0
    %v715 = vadd.f32 0.0, %v714
    %v716 = vpop.f32.mrb[0].mxu0
    %v717 = vpop.f32.mrb[0].mxu0
    %v718 = vadd.f32 0.0, %v717
    %v719 = vpop.f32.mrb[0].mxu0
    %720 = vmatprep.mubr.bf16.mxu0 0
    %721 = vmatmul.mubr.bf16.gmra.mrb[0].mxu0 %v660
    %v722 = vpop.f32.mrb[0].mxu0
    %v723 = vadd.f32 0.0, %v722
    %v724 = vpop.f32.mrb[0].mxu0
    %v725 = vpop.f32.mrb[0].mxu0
    %v726 = vadd.f32 0.0, %v725
    %v727 = vpop.f32.mrb[0].mxu0
    %728 = vmatprep.mubr.bf16.mxu0 0
    %729 = vmatmul.mubr.bf16.gmra.mrb[0].mxu0 %v663
    %v730 = vpop.f32.mrb[0].mxu0
    %v731 = vadd.f32 0.0, %v730
    %v732 = vpop.f32.mrb[0].mxu0
    %v733 = vpop.f32.mrb[0].mxu0
    %v734 = vadd.f32 0.0, %v733
    %v735 = vpop.f32.mrb[0].mxu0
    %736 = vmatprep.mubr.bf16.mxu0 0
    %737 = vmatmul.mubr.bf16.gmra.mrb[0].mxu0 %v666
    %v738 = vpop.f32.mrb[0].mxu0
    %v739 = vadd.f32 0.0, %v738
    %v740 = vpop.f32.mrb[0].mxu0
    %v741 = vpop.f32.mrb[0].mxu0
    %v742 = vadd.f32 0.0, %v741
    %v743 = vpop.f32.mrb[0].mxu0
    %744 = vmatprep.mubr.bf16.mxu0 0
    %745 = vmatmul.mubr.bf16.gmra.mrb[0].mxu0 %v669
    %v746 = vpop.f32.mrb[0].mxu0
    %v747 = vadd.f32 0.0, %v746
    %v748 = vpop.f32.mrb[0].mxu0
    %v749 = vpop.f32.mrb[0].mxu0
    %v750 = vadd.f32 0.0, %v749
    %v751 = vpop.f32.mrb[0].mxu0
    %752 = vmatprep.mubr.bf16.mxu0 0
    %753 = vmatmul.mubr.bf16.gmra.mrb[0].mxu0 %v672
    %v754 = vpop.f32.mrb[0].mxu0
    %v755 = vadd.f32 0.0, %v754
    %v756 = vpop.f32.mrb[0].mxu0
    %v757 = vpop.f32.mrb[0].mxu0
    %v758 = vadd.f32 0.0, %v757
    %v759 = vpop.f32.mrb[0].mxu0
    %760 = vmatprep.mubr.bf16.mxu0 0
    %761 = vmatmul.mubr.bf16.gmra.mrb[0].mxu0 %v675
    %v762 = vpop.f32.mrb[0].mxu0
    %v763 = vadd.f32 0.0, %v762
    %v764 = vpop.f32.mrb[0].mxu0
    %v765 = vpop.f32.mrb[0].mxu0
    %v766 = vadd.f32 0.0, %v765
    %v767 = vpop.f32.mrb[0].mxu0
    %768 = vmatprep.mubr.bf16.mxu0 0
    %769 = vmatmul.mubr.bf16.gmra.mrb[0].mxu0 %v678
    %v770 = vpop.f32.mrb[0].mxu0
    %v771 = vadd.f32 0.0, %v770
    %v772 = vpop.f32.mrb[0].mxu0
    %v773 = vpop.f32.mrb[0].mxu0
    %v774 = vadd.f32 0.0, %v773
    %v775 = vpop.f32.mrb[0].mxu0
    %776 = vdwg.mxu0
    %v781 = vunpack.c.l.b16 %v628
    %v782 = vunpack.c.l.b16 %v629
    %v783 = vunpack.c.l.b16 %v630
    %v784 = vunpack.c.l.b16 %v631
    %v785 = vpack.c.b16 %v782, %v781
    %v786 = vpack.c.b16 %v784, %v783
    %v790 = vsel %vm142, %v620, 0
    %v793 = vsel %vm142, %v621, 0
    %v796 = vsel %vm142, %v622, 0
    %v799 = vsel %vm142, %v623, 0
    %v802 = vsel %vm142, %v624, 0
    %v805 = vsel %vm142, %v625, 0
    %v808 = vsel %vm142, %v626, 0
    %v811 = vsel %vm142, %v627, 0
    %813 = vmatprep.subr.bf16.mxu0 0
    %814 = vmatpush1.bf16.msra.mxu0 %v785
    %815 = vmatprep.subr.bf16.mxu0 0
    %816 = vmatpush1.bf16.msra.mxu0 %v786
    %817 = vmatprep.subr.bf16.mxu0 0
    %818 = vmatpush1.bf16.msra.mxu0 0
    %819 = vmatprep.subr.bf16.mxu0 0
    %820 = vmatpush1.bf16.msra.mxu0 0
    %821 = vmatprep.subr.bf16.mxu0 0
    %822 = vmatpush1.bf16.msra.mxu0 0
    %823 = vmatprep.subr.bf16.mxu0 0
    %824 = vmatpush1.bf16.msra.mxu0 0
    %825 = vmatprep.subr.bf16.mxu0 0
    %826 = vmatpush1.bf16.msra.mxu0 0
    %827 = vmatprep.subr.bf16.mxu0 0
    %828 = vmatpush1.bf16.msra.mxu0 0
    %829 = vmatprep.subr.bf16.mxu0 0
    %830 = vmatpush1.bf16.msra.mxu0 0
    %831 = vmatprep.subr.bf16.mxu0 0
    %832 = vmatpush1.bf16.msra.mxu0 0
    %833 = vmatprep.subr.bf16.mxu0 0
    %834 = vmatpush1.bf16.msra.mxu0 0
    %835 = vmatprep.subr.bf16.mxu0 0
    %836 = vmatpush1.bf16.msra.mxu0 0
    %837 = vmatprep.subr.bf16.mxu0 0
    %838 = vmatpush1.bf16.msra.mxu0 0
    %839 = vmatprep.subr.bf16.mxu0 0
    %840 = vmatpush1.bf16.msra.mxu0 0
    %841 = vmatprep.subr.bf16.mxu0 0
    %842 = vmatpush1.bf16.msra.mxu0 0
    %843 = vmatprep.subr.bf16.mxu0 0
    %844 = vmatpush1.bf16.msra.mxu0 0
    %845 = vmatprep.mubr.bf16.mxu0 0
    %846 = vmatmul.mubr.bf16.gmra.mrb[0].mxu0 %v790
    %v847 = vpop.f32.mrb[0].mxu0
    %v848 = vadd.f32 %v715, %v847
    %v849 = vpop.f32.mrb[0].mxu0
    %v850 = vpop.f32.mrb[0].mxu0
    %v851 = vadd.f32 %v718, %v850
    %v852 = vpop.f32.mrb[0].mxu0
    %853 = vmatprep.mubr.bf16.mxu0 0
    %854 = vmatmul.mubr.bf16.gmra.mrb[0].mxu0 %v793
    %v855 = vpop.f32.mrb[0].mxu0
    %v856 = vadd.f32 %v723, %v855
    %v857 = vpop.f32.mrb[0].mxu0
    %v858 = vpop.f32.mrb[0].mxu0
    %v859 = vadd.f32 %v726, %v858
    %v860 = vpop.f32.mrb[0].mxu0
    %861 = vmatprep.mubr.bf16.mxu0 0
    %862 = vmatmul.mubr.bf16.gmra.mrb[0].mxu0 %v796
    %v863 = vpop.f32.mrb[0].mxu0
    %v864 = vadd.f32 %v731, %v863
    %v865 = vpop.f32.mrb[0].mxu0
    %v866 = vpop.f32.mrb[0].mxu0
    %v867 = vadd.f32 %v734, %v866
    %v868 = vpop.f32.mrb[0].mxu0
    %869 = vmatprep.mubr.bf16.mxu0 0
    %870 = vmatmul.mubr.bf16.gmra.mrb[0].mxu0 %v799
    %v871 = vpop.f32.mrb[0].mxu0
    %v872 = vadd.f32 %v739, %v871
    %v873 = vpop.f32.mrb[0].mxu0
    %v874 = vpop.f32.mrb[0].mxu0
    %v875 = vadd.f32 %v742, %v874
    %v876 = vpop.f32.mrb[0].mxu0
    %877 = vmatprep.mubr.bf16.mxu0 0
    %878 = vmatmul.mubr.bf16.gmra.mrb[0].mxu0 %v802
    %v879 = vpop.f32.mrb[0].mxu0
    %v880 = vadd.f32 %v747, %v879
    %v881 = vpop.f32.mrb[0].mxu0
    %v882 = vpop.f32.mrb[0].mxu0
    %v883 = vadd.f32 %v750, %v882
    %v884 = vpop.f32.mrb[0].mxu0
    %885 = vmatprep.mubr.bf16.mxu0 0
    %886 = vmatmul.mubr.bf16.gmra.mrb[0].mxu0 %v805
    %v887 = vpop.f32.mrb[0].mxu0
    %v888 = vadd.f32 %v755, %v887
    %v889 = vpop.f32.mrb[0].mxu0
    %v890 = vpop.f32.mrb[0].mxu0
    %v891 = vadd.f32 %v758, %v890
    %v892 = vpop.f32.mrb[0].mxu0
    %893 = vmatprep.mubr.bf16.mxu0 0
    %894 = vmatmul.mubr.bf16.gmra.mrb[0].mxu0 %v808
    %v895 = vpop.f32.mrb[0].mxu0
    %v896 = vadd.f32 %v763, %v895
    %v897 = vpop.f32.mrb[0].mxu0
    %v898 = vpop.f32.mrb[0].mxu0
    %v899 = vadd.f32 %v766, %v898
    %v900 = vpop.f32.mrb[0].mxu0
    %901 = vmatprep.mubr.bf16.mxu0 0
    %902 = vmatmul.mubr.bf16.gmra.mrb[0].mxu0 %v811
    %v903 = vpop.f32.mrb[0].mxu0
    %v904 = vadd.f32 %v771, %v903
    %v905 = vpop.f32.mrb[0].mxu0
    %v906 = vpop.f32.mrb[0].mxu0
    %v907 = vadd.f32 %v774, %v906
    %v908 = vpop.f32.mrb[0].mxu0
    %909 = vdwg.mxu0
    %v910 = vld [vmem:[%s10] sm:$0x1]
    %v912 = vlaneseq
    %v913 = vshrl.u32 %v912, 7
    %v914 = vsub.s32 0, %v913
    %v915 = vrot.slane %v910, %v914
    %v917 = vadd.f32 %v848, %v915
    %v918 = vadd.f32 %v851, %v915
    %v919 = vadd.f32 %v856, %v915
    %v920 = vadd.f32 %v859, %v915
    %v921 = vadd.f32 %v864, %v915
    %v922 = vadd.f32 %v867, %v915
    %v923 = vadd.f32 %v872, %v915
    %v924 = vadd.f32 %v875, %v915
    %v925 = vadd.f32 %v880, %v915
    %v926 = vadd.f32 %v883, %v915
    %v927 = vadd.f32 %v888, %v915
    %v928 = vadd.f32 %v891, %v915
    %v929 = vadd.f32 %v896, %v915
    %v930 = vadd.f32 %v899, %v915
    %v931 = vadd.f32 %v904, %v915
    %v932 = vadd.f32 %v907, %v915
    %v933 = vmul.f32 %v917, 0.5
    %v934 = vmul.f32 %v918, 0.5
    %v935 = vmul.f32 %v919, 0.5
    %v936 = vmul.f32 %v920, 0.5
    %v937 = vmul.f32 %v921, 0.5
    %v938 = vmul.f32 %v922, 0.5
    %v939 = vmul.f32 %v923, 0.5
    %v940 = vmul.f32 %v924, 0.5
    %v941 = vmul.f32 %v925, 0.5
    %v942 = vmul.f32 %v926, 0.5
    %v943 = vmul.f32 %v927, 0.5
    %v944 = vmul.f32 %v928, 0.5
    %v945 = vmul.f32 %v929, 0.5
    %v946 = vmul.f32 %v930, 0.5
    %v947 = vmul.f32 %v931, 0.5
    %v948 = vmul.f32 %v932, 0.5
    %v949 = vmul.f32 %v917, 0.044715
    %v950 = vmul.f32 %v918, 0.044715
    %v951 = vmul.f32 %v919, 0.044715
    %v952 = vmul.f32 %v920, 0.044715
    %v953 = vmul.f32 %v921, 0.044715
    %v954 = vmul.f32 %v922, 0.044715
    %v955 = vmul.f32 %v923, 0.044715
    %v956 = vmul.f32 %v924, 0.044715
    %v957 = vmul.f32 %v925, 0.044715
    %v958 = vmul.f32 %v926, 0.044715
    %v959 = vmul.f32 %v927, 0.044715
    %v960 = vmul.f32 %v928, 0.044715
    %v961 = vmul.f32 %v929, 0.044715
    %v962 = vmul.f32 %v930, 0.044715
    %v963 = vmul.f32 %v931, 0.044715
    %v964 = vmul.f32 %v932, 0.044715
    %v965 = vmul.f32 %v949, %v917
    %v966 = vmul.f32 %v950, %v918
    %v967 = vmul.f32 %v951, %v919
    %v968 = vmul.f32 %v952, %v920
    %v969 = vmul.f32 %v953, %v921
    %v970 = vmul.f32 %v954, %v922
    %v971 = vmul.f32 %v955, %v923
    %v972 = vmul.f32 %v956, %v924
    %v973 = vmul.f32 %v957, %v925
    %v974 = vmul.f32 %v958, %v926
    %v975 = vmul.f32 %v959, %v927
    %v976 = vmul.f32 %v960, %v928
    %v977 = vmul.f32 %v961, %v929
    %v978 = vmul.f32 %v962, %v930
    %v979 = vmul.f32 %v963, %v931
    %v980 = vmul.f32 %v964, %v932
    %v981 = vmul.f32 %v965, %v917
    %v982 = vmul.f32 %v966, %v918
    %v983 = vmul.f32 %v967, %v919
    %v984 = vmul.f32 %v968, %v920
    %v985 = vmul.f32 %v969, %v921
    %v986 = vmul.f32 %v970, %v922
    %v987 = vmul.f32 %v971, %v923
    %v988 = vmul.f32 %v972, %v924
    %v989 = vmul.f32 %v973, %v925
    %v990 = vmul.f32 %v974, %v926
    %v991 = vmul.f32 %v975, %v927
    %v992 = vmul.f32 %v976, %v928
    %v993 = vmul.f32 %v977, %v929
    %v994 = vmul.f32 %v978, %v930
    %v995 = vmul.f32 %v979, %v931
    %v996 = vmul.f32 %v980, %v932
    %v997 = vadd.f32 %v917, %v981
    %v998 = vadd.f32 %v918, %v982
    %v999 = vadd.f32 %v919, %v983
    %v1000 = vadd.f32 %v920, %v984
    %v1001 = vadd.f32 %v921, %v985
    %v1002 = vadd.f32 %v922, %v986
    %v1003 = vadd.f32 %v923, %v987
    %v1004 = vadd.f32 %v924, %v988
    %v1005 = vadd.f32 %v925, %v989
    %v1006 = vadd.f32 %v926, %v990
    %v1007 = vadd.f32 %v927, %v991
    %v1008 = vadd.f32 %v928, %v992
    %v1009 = vadd.f32 %v929, %v993
    %v1010 = vadd.f32 %v930, %v994
    %v1011 = vadd.f32 %v931, %v995
    %v1012 = vadd.f32 %v932, %v996
    %v1013 = vmul.f32 %v997, 0.7978846
    %v1014 = vmul.f32 %v998, 0.7978846
    %v1015 = vmul.f32 %v999, 0.7978846
    %v1016 = vmul.f32 %v1000, 0.7978846
    %v1017 = vmul.f32 %v1001, 0.7978846
    %v1018 = vmul.f32 %v1002, 0.7978846
    %v1019 = vmul.f32 %v1003, 0.7978846
    %v1020 = vmul.f32 %v1004, 0.7978846
    %v1021 = vmul.f32 %v1005, 0.7978846
    %v1022 = vmul.f32 %v1006, 0.7978846
    %v1023 = vmul.f32 %v1007, 0.7978846
    %v1024 = vmul.f32 %v1008, 0.7978846
    %v1025 = vmul.f32 %v1009, 0.7978846
    %v1026 = vmul.f32 %v1010, 0.7978846
    %v1027 = vmul.f32 %v1011, 0.7978846
    %v1028 = vmul.f32 %v1012, 0.7978846
    %v1029 = vtanh.pop %v1013
    %v1030 = vtanh.pop %v1014
    %v1031 = vtanh.pop %v1015
    %v1032 = vtanh.pop %v1016
    %v1033 = vtanh.pop %v1017
    %v1034 = vtanh.pop %v1018
    %v1035 = vtanh.pop %v1019
    %v1036 = vtanh.pop %v1020
    %v1037 = vtanh.pop %v1021
    %v1038 = vtanh.pop %v1022
    %v1039 = vtanh.pop %v1023
    %v1040 = vtanh.pop %v1024
    %v1041 = vtanh.pop %v1025
    %v1042 = vtanh.pop %v1026
    %v1043 = vtanh.pop %v1027
    %v1044 = vtanh.pop %v1028
    %v1045 = vadd.f32 %v1029, 1.0
    %v1046 = vadd.f32 %v1030, 1.0
    %v1047 = vadd.f32 %v1031, 1.0
    %v1048 = vadd.f32 %v1032, 1.0
    %v1049 = vadd.f32 %v1033, 1.0
    %v1050 = vadd.f32 %v1034, 1.0
    %v1051 = vadd.f32 %v1035, 1.0
    %v1052 = vadd.f32 %v1036, 1.0
    %v1053 = vadd.f32 %v1037, 1.0
    %v1054 = vadd.f32 %v1038, 1.0
    %v1055 = vadd.f32 %v1039, 1.0
    %v1056 = vadd.f32 %v1040, 1.0
    %v1057 = vadd.f32 %v1041, 1.0
    %v1058 = vadd.f32 %v1042, 1.0
    %v1059 = vadd.f32 %v1043, 1.0
    %v1060 = vadd.f32 %v1044, 1.0
    %v1061 = vmul.f32 %v933, %v1045
    %v1062 = vmul.f32 %v934, %v1046
    %v1063 = vmul.f32 %v935, %v1047
    %v1064 = vmul.f32 %v936, %v1048
    %v1065 = vmul.f32 %v937, %v1049
    %v1066 = vmul.f32 %v938, %v1050
    %v1067 = vmul.f32 %v939, %v1051
    %v1068 = vmul.f32 %v940, %v1052
    %v1069 = vmul.f32 %v941, %v1053
    %v1070 = vmul.f32 %v942, %v1054
    %v1071 = vmul.f32 %v943, %v1055
    %v1072 = vmul.f32 %v944, %v1056
    %v1073 = vmul.f32 %v945, %v1057
    %v1074 = vmul.f32 %v946, %v1058
    %v1075 = vmul.f32 %v947, %v1059
    %v1076 = vmul.f32 %v948, %v1060
    %v1077 = vpack.c.bf16 %v1062, %v1061
    %v1078 = vpack.c.bf16 %v1064, %v1063
    %v1079 = vpack.c.bf16 %v1066, %v1065
    %v1080 = vpack.c.bf16 %v1068, %v1067
    %v1081 = vpack.c.bf16 %v1070, %v1069
    %v1082 = vpack.c.bf16 %v1072, %v1071
    %v1083 = vpack.c.bf16 %v1074, %v1073
    %v1084 = vpack.c.bf16 %v1076, %v1075
    %v1085 = vld [vmem:[%s11] sm:$0xf]
    %v1086 = vld [vmem:[%s11 + $0x4] sm:$0xf]
    %v1087 = vld [vmem:[%s11 + $0x8] sm:$0xf]
    %v1088 = vld [vmem:[%s11 + $0xc] sm:$0xf]
    %v1089 = vld [vmem:[%s12] sm:$0x1]
    %v1091 = vlaneseq
    %v1092 = vshrl.u32 %v1091, 7
    %v1093 = vsub.s32 0, %v1092
    %v1094 = vrot.slane %v1089, %v1093
    %v1100 = vunpack.c.l.b16 %v1085
    %v1101 = vunpack.c.l.b16 %v1086
    %v1102 = vunpack.c.l.b16 %v1087
    %v1103 = vunpack.c.l.b16 %v1088
    %v1104 = vpack.c.b16 %v1101, %v1100
    %v1105 = vpack.c.b16 %v1103, %v1102
    %v1109 = vsel %vm142, %v1077, 0
    %v1112 = vsel %vm142, %v1078, 0
    %v1115 = vsel %vm142, %v1079, 0
    %v1118 = vsel %vm142, %v1080, 0
    %v1121 = vsel %vm142, %v1081, 0
    %v1124 = vsel %vm142, %v1082, 0
    %v1127 = vsel %vm142, %v1083, 0
    %v1130 = vsel %vm142, %v1084, 0
    %1132 = vmatprep.subr.bf16.mxu0 0
    %1133 = vmatpush1.bf16.msra.mxu0 %v1104
    %1134 = vmatprep.subr.bf16.mxu0 0
    %1135 = vmatpush1.bf16.msra.mxu0 %v1105
    %1136 = vmatprep.subr.bf16.mxu0 0
    %1137 = vmatpush1.bf16.msra.mxu0 0
    %1138 = vmatprep.subr.bf16.mxu0 0
    %1139 = vmatpush1.bf16.msra.mxu0 0
    %1140 = vmatprep.subr.bf16.mxu0 0
    %1141 = vmatpush1.bf16.msra.mxu0 0
    %1142 = vmatprep.subr.bf16.mxu0 0
    %1143 = vmatpush1.bf16.msra.mxu0 0
    %1144 = vmatprep.subr.bf16.mxu0 0
    %1145 = vmatpush1.bf16.msra.mxu0 0
    %1146 = vmatprep.subr.bf16.mxu0 0
    %1147 = vmatpush1.bf16.msra.mxu0 0
    %1148 = vmatprep.subr.bf16.mxu0 0
    %1149 = vmatpush1.bf16.msra.mxu0 0
    %1150 = vmatprep.subr.bf16.mxu0 0
    %1151 = vmatpush1.bf16.msra.mxu0 0
    %1152 = vmatprep.subr.bf16.mxu0 0
    %1153 = vmatpush1.bf16.msra.mxu0 0
    %1154 = vmatprep.subr.bf16.mxu0 0
    %1155 = vmatpush1.bf16.msra.mxu0 0
    %1156 = vmatprep.subr.bf16.mxu0 0
    %1157 = vmatpush1.bf16.msra.mxu0 0
    %1158 = vmatprep.subr.bf16.mxu0 0
    %1159 = vmatpush1.bf16.msra.mxu0 0
    %1160 = vmatprep.subr.bf16.mxu0 0
    %1161 = vmatpush1.bf16.msra.mxu0 0
    %1162 = vmatprep.subr.bf16.mxu0 0
    %1163 = vmatpush1.bf16.msra.mxu0 0
    %1164 = vmatprep.mubr.bf16.mxu0 0
    %1165 = vmatmul.mubr.bf16.gmra.mrb[0].mxu0 %v1109
    %v1166 = vpop.f32.mrb[0].mxu0
    %v1167 = vadd.f32 %v1094, %v1166
    %v1168 = vpop.f32.mrb[0].mxu0
    %v1169 = vpop.f32.mrb[0].mxu0
    %v1170 = vadd.f32 %v1094, %v1169
    %v1171 = vpop.f32.mrb[0].mxu0
    %1172 = vmatprep.mubr.bf16.mxu0 0
    %1173 = vmatmul.mubr.bf16.gmra.mrb[0].mxu0 %v1112
    %v1174 = vpop.f32.mrb[0].mxu0
    %v1175 = vadd.f32 %v1094, %v1174
    %v1176 = vpop.f32.mrb[0].mxu0
    %v1177 = vpop.f32.mrb[0].mxu0
    %v1178 = vadd.f32 %v1094, %v1177
    %v1179 = vpop.f32.mrb[0].mxu0
    %1180 = vmatprep.mubr.bf16.mxu0 0
    %1181 = vmatmul.mubr.bf16.gmra.mrb[0].mxu0 %v1115
    %v1182 = vpop.f32.mrb[0].mxu0
    %v1183 = vadd.f32 %v1094, %v1182
    %v1184 = vpop.f32.mrb[0].mxu0
    %v1185 = vpop.f32.mrb[0].mxu0
    %v1186 = vadd.f32 %v1094, %v1185
    %v1187 = vpop.f32.mrb[0].mxu0
    %1188 = vmatprep.mubr.bf16.mxu0 0
    %1189 = vmatmul.mubr.bf16.gmra.mrb[0].mxu0 %v1118
    %v1190 = vpop.f32.mrb[0].mxu0
    %v1191 = vadd.f32 %v1094, %v1190
    %v1192 = vpop.f32.mrb[0].mxu0
    %v1193 = vpop.f32.mrb[0].mxu0
    %v1194 = vadd.f32 %v1094, %v1193
    %v1195 = vpop.f32.mrb[0].mxu0
    %1196 = vmatprep.mubr.bf16.mxu0 0
    %1197 = vmatmul.mubr.bf16.gmra.mrb[0].mxu0 %v1121
    %v1198 = vpop.f32.mrb[0].mxu0
    %v1199 = vadd.f32 %v1094, %v1198
    %v1200 = vpop.f32.mrb[0].mxu0
    %v1201 = vpop.f32.mrb[0].mxu0
    %v1202 = vadd.f32 %v1094, %v1201
    %v1203 = vpop.f32.mrb[0].mxu0
    %1204 = vmatprep.mubr.bf16.mxu0 0
    %1205 = vmatmul.mubr.bf16.gmra.mrb[0].mxu0 %v1124
    %v1206 = vpop.f32.mrb[0].mxu0
    %v1207 = vadd.f32 %v1094, %v1206
    %v1208 = vpop.f32.mrb[0].mxu0
    %v1209 = vpop.f32.mrb[0].mxu0
    %v1210 = vadd.f32 %v1094, %v1209
    %v1211 = vpop.f32.mrb[0].mxu0
    %1212 = vmatprep.mubr.bf16.mxu0 0
    %1213 = vmatmul.mubr.bf16.gmra.mrb[0].mxu0 %v1127
    %v1214 = vpop.f32.mrb[0].mxu0
    %v1215 = vadd.f32 %v1094, %v1214
    %v1216 = vpop.f32.mrb[0].mxu0
    %v1217 = vpop.f32.mrb[0].mxu0
    %v1218 = vadd.f32 %v1094, %v1217
    %v1219 = vpop.f32.mrb[0].mxu0
    %1220 = vmatprep.mubr.bf16.mxu0 0
    %1221 = vmatmul.mubr.bf16.gmra.mrb[0].mxu0 %v1130
    %v1222 = vpop.f32.mrb[0].mxu0
    %v1223 = vadd.f32 %v1094, %v1222
    %v1224 = vpop.f32.mrb[0].mxu0
    %v1225 = vpop.f32.mrb[0].mxu0
    %v1226 = vadd.f32 %v1094, %v1225
    %v1227 = vpop.f32.mrb[0].mxu0
    %1228 = vdwg.mxu0
    %v1229 = vadd.f32 %v1167, %v110
    %v1230 = vadd.f32 %v1170, %v111
    %v1231 = vadd.f32 %v1175, %v112
    %v1232 = vadd.f32 %v1178, %v113
    %v1233 = vadd.f32 %v1183, %v114
    %v1234 = vadd.f32 %v1186, %v115
    %v1235 = vadd.f32 %v1191, %v116
    %v1236 = vadd.f32 %v1194, %v117
    %v1237 = vadd.f32 %v1199, %v118
    %v1238 = vadd.f32 %v1202, %v119
    %v1239 = vadd.f32 %v1207, %v120
    %v1240 = vadd.f32 %v1210, %v121
    %v1241 = vadd.f32 %v1215, %v122
    %v1242 = vadd.f32 %v1218, %v123
    %v1243 = vadd.f32 %v1223, %v124
    %v1244 = vadd.f32 %v1226, %v125
    %v1245 = vld [vmem:[%s13] sm:$0x1]
    %v1246 = vld [vmem:[%s14] sm:$0x1]
    %v1247 = vsel %vm142, %v1229, 0.0
    %1248 = vadd.xlane.f32.xlu0 %v1247
    %v1249 = vpop.xlane.xlu0 %1248
    %v1250 = vsel %vm142, %v1230, 0.0
    %1251 = vadd.xlane.f32.xlu0 %v1250
    %v1252 = vpop.xlane.xlu0 %1251
    %v1253 = vsel %vm142, %v1231, 0.0
    %1254 = vadd.xlane.f32.xlu0 %v1253
    %v1255 = vpop.xlane.xlu0 %1254
    %v1256 = vsel %vm142, %v1232, 0.0
    %1257 = vadd.xlane.f32.xlu0 %v1256
    %v1258 = vpop.xlane.xlu0 %1257
    %v1259 = vsel %vm142, %v1233, 0.0
    %1260 = vadd.xlane.f32.xlu0 %v1259
    %v1261 = vpop.xlane.xlu0 %1260
    %v1262 = vsel %vm142, %v1234, 0.0
    %1263 = vadd.xlane.f32.xlu0 %v1262
    %v1264 = vpop.xlane.xlu0 %1263
    %v1265 = vsel %vm142, %v1235, 0.0
    %1266 = vadd.xlane.f32.xlu0 %v1265
    %v1267 = vpop.xlane.xlu0 %1266
    %v1268 = vsel %vm142, %v1236, 0.0
    %1269 = vadd.xlane.f32.xlu0 %v1268
    %v1270 = vpop.xlane.xlu0 %1269
    %v1271 = vsel %vm142, %v1237, 0.0
    %1272 = vadd.xlane.f32.xlu0 %v1271
    %v1273 = vpop.xlane.xlu0 %1272
    %v1274 = vsel %vm142, %v1238, 0.0
    %1275 = vadd.xlane.f32.xlu0 %v1274
    %v1276 = vpop.xlane.xlu0 %1275
    %v1277 = vsel %vm142, %v1239, 0.0
    %1278 = vadd.xlane.f32.xlu0 %v1277
    %v1279 = vpop.xlane.xlu0 %1278
    %v1280 = vsel %vm142, %v1240, 0.0
    %1281 = vadd.xlane.f32.xlu0 %v1280
    %v1282 = vpop.xlane.xlu0 %1281
    %v1283 = vsel %vm142, %v1241, 0.0
    %1284 = vadd.xlane.f32.xlu0 %v1283
    %v1285 = vpop.xlane.xlu0 %1284
    %v1286 = vsel %vm142, %v1242, 0.0
    %1287 = vadd.xlane.f32.xlu0 %v1286
    %v1288 = vpop.xlane.xlu0 %1287
    %v1289 = vsel %vm142, %v1243, 0.0
    %1290 = vadd.xlane.f32.xlu0 %v1289
    %v1291 = vpop.xlane.xlu0 %1290
    %v1292 = vsel %vm142, %v1244, 0.0
    %1293 = vadd.xlane.f32.xlu0 %v1292
    %v1294 = vpop.xlane.xlu0 %1293
    %v1295 = vrcp.pop 32.0
    %v1296 = vmul.f32 %v1249, %v1295
    %v1297 = vmul.f32 %v1252, %v1295
    %v1298 = vmul.f32 %v1255, %v1295
    %v1299 = vmul.f32 %v1258, %v1295
    %v1300 = vmul.f32 %v1261, %v1295
    %v1301 = vmul.f32 %v1264, %v1295
    %v1302 = vmul.f32 %v1267, %v1295
    %v1303 = vmul.f32 %v1270, %v1295
    %v1304 = vmul.f32 %v1273, %v1295
    %v1305 = vmul.f32 %v1276, %v1295
    %v1306 = vmul.f32 %v1279, %v1295
    %v1307 = vmul.f32 %v1282, %v1295
    %v1308 = vmul.f32 %v1285, %v1295
    %v1309 = vmul.f32 %v1288, %v1295
    %v1310 = vmul.f32 %v1291, %v1295
    %v1311 = vmul.f32 %v1294, %v1295
    %v1312 = vsub.f32 %v1229, %v1296
    %v1313 = vsub.f32 %v1230, %v1297
    %v1314 = vsub.f32 %v1231, %v1298
    %v1315 = vsub.f32 %v1232, %v1299
    %v1316 = vsub.f32 %v1233, %v1300
    %v1317 = vsub.f32 %v1234, %v1301
    %v1318 = vsub.f32 %v1235, %v1302
    %v1319 = vsub.f32 %v1236, %v1303
    %v1320 = vsub.f32 %v1237, %v1304
    %v1321 = vsub.f32 %v1238, %v1305
    %v1322 = vsub.f32 %v1239, %v1306
    %v1323 = vsub.f32 %v1240, %v1307
    %v1324 = vsub.f32 %v1241, %v1308
    %v1325 = vsub.f32 %v1242, %v1309
    %v1326 = vsub.f32 %v1243, %v1310
    %v1327 = vsub.f32 %v1244, %v1311
    %v1328 = vmul.f32 %v1312, %v1312
    %v1329 = vmul.f32 %v1313, %v1313
    %v1330 = vmul.f32 %v1314, %v1314
    %v1331 = vmul.f32 %v1315, %v1315
    %v1332 = vmul.f32 %v1316, %v1316
    %v1333 = vmul.f32 %v1317, %v1317
    %v1334 = vmul.f32 %v1318, %v1318
    %v1335 = vmul.f32 %v1319, %v1319
    %v1336 = vmul.f32 %v1320, %v1320
    %v1337 = vmul.f32 %v1321, %v1321
    %v1338 = vmul.f32 %v1322, %v1322
    %v1339 = vmul.f32 %v1323, %v1323
    %v1340 = vmul.f32 %v1324, %v1324
    %v1341 = vmul.f32 %v1325, %v1325
    %v1342 = vmul.f32 %v1326, %v1326
    %v1343 = vmul.f32 %v1327, %v1327
    %v1344 = vsel %vm142, %v1328, 0.0
    %1345 = vadd.xlane.f32.xlu0 %v1344
    %v1346 = vpop.xlane.xlu0 %1345
    %v1347 = vsel %vm142, %v1329, 0.0
    %1348 = vadd.xlane.f32.xlu0 %v1347
    %v1349 = vpop.xlane.xlu0 %1348
    %v1350 = vsel %vm142, %v1330, 0.0
    %1351 = vadd.xlane.f32.xlu0 %v1350
    %v1352 = vpop.xlane.xlu0 %1351
    %v1353 = vsel %vm142, %v1331, 0.0
    %1354 = vadd.xlane.f32.xlu0 %v1353
    %v1355 = vpop.xlane.xlu0 %1354
    %v1356 = vsel %vm142, %v1332, 0.0
    %1357 = vadd.xlane.f32.xlu0 %v1356
    %v1358 = vpop.xlane.xlu0 %1357
    %v1359 = vsel %vm142, %v1333, 0.0
    %1360 = vadd.xlane.f32.xlu0 %v1359
    %v1361 = vpop.xlane.xlu0 %1360
    %v1362 = vsel %vm142, %v1334, 0.0
    %1363 = vadd.xlane.f32.xlu0 %v1362
    %v1364 = vpop.xlane.xlu0 %1363
    %v1365 = vsel %vm142, %v1335, 0.0
    %1366 = vadd.xlane.f32.xlu0 %v1365
    %v1367 = vpop.xlane.xlu0 %1366
    %v1368 = vsel %vm142, %v1336, 0.0
    %1369 = vadd.xlane.f32.xlu0 %v1368
    %v1370 = vpop.xlane.xlu0 %1369
    %v1371 = vsel %vm142, %v1337, 0.0
    %1372 = vadd.xlane.f32.xlu0 %v1371
    %v1373 = vpop.xlane.xlu0 %1372
    %v1374 = vsel %vm142, %v1338, 0.0
    %1375 = vadd.xlane.f32.xlu0 %v1374
    %v1376 = vpop.xlane.xlu0 %1375
    %v1377 = vsel %vm142, %v1339, 0.0
    %1378 = vadd.xlane.f32.xlu0 %v1377
    %v1379 = vpop.xlane.xlu0 %1378
    %v1380 = vsel %vm142, %v1340, 0.0
    %1381 = vadd.xlane.f32.xlu0 %v1380
    %v1382 = vpop.xlane.xlu0 %1381
    %v1383 = vsel %vm142, %v1341, 0.0
    %1384 = vadd.xlane.f32.xlu0 %v1383
    %v1385 = vpop.xlane.xlu0 %1384
    %v1386 = vsel %vm142, %v1342, 0.0
    %1387 = vadd.xlane.f32.xlu0 %v1386
    %v1388 = vpop.xlane.xlu0 %1387
    %v1389 = vsel %vm142, %v1343, 0.0
    %1390 = vadd.xlane.f32.xlu0 %v1389
    %v1391 = vpop.xlane.xlu0 %1390
    %v1392 = vmul.f32 %v1346, %v1295
    %v1393 = vmul.f32 %v1349, %v1295
    %v1394 = vmul.f32 %v1352, %v1295
    %v1395 = vmul.f32 %v1355, %v1295
    %v1396 = vmul.f32 %v1358, %v1295
    %v1397 = vmul.f32 %v1361, %v1295
    %v1398 = vmul.f32 %v1364, %v1295
    %v1399 = vmul.f32 %v1367, %v1295
    %v1400 = vmul.f32 %v1370, %v1295
    %v1401 = vmul.f32 %v1373, %v1295
    %v1402 = vmul.f32 %v1376, %v1295
    %v1403 = vmul.f32 %v1379, %v1295
    %v1404 = vmul.f32 %v1382, %v1295
    %v1405 = vmul.f32 %v1385, %v1295
    %v1406 = vmul.f32 %v1388, %v1295
    %v1407 = vmul.f32 %v1391, %v1295
    %v1408 = vadd.f32 %v1392, 1e-05
    %v1409 = vadd.f32 %v1393, 1e-05
    %v1410 = vadd.f32 %v1394, 1e-05
    %v1411 = vadd.f32 %v1395, 1e-05
    %v1412 = vadd.f32 %v1396, 1e-05
    %v1413 = vadd.f32 %v1397, 1e-05
    %v1414 = vadd.f32 %v1398, 1e-05
    %v1415 = vadd.f32 %v1399, 1e-05
    %v1416 = vadd.f32 %v1400, 1e-05
    %v1417 = vadd.f32 %v1401, 1e-05
    %v1418 = vadd.f32 %v1402, 1e-05
    %v1419 = vadd.f32 %v1403, 1e-05
    %v1420 = vadd.f32 %v1404, 1e-05
    %v1421 = vadd.f32 %v1405, 1e-05
    %v1422 = vadd.f32 %v1406, 1e-05
    %v1423 = vadd.f32 %v1407, 1e-05
    %v1424 = vrsqrt.pop %v1408
    %v1425 = vrsqrt.pop %v1409
    %v1426 = vrsqrt.pop %v1410
    %v1427 = vrsqrt.pop %v1411
    %v1428 = vrsqrt.pop %v1412
    %v1429 = vrsqrt.pop %v1413
    %v1430 = vrsqrt.pop %v1414
    %v1431 = vrsqrt.pop %v1415
    %v1432 = vrsqrt.pop %v1416
    %v1433 = vrsqrt.pop %v1417
    %v1434 = vrsqrt.pop %v1418
    %v1435 = vrsqrt.pop %v1419
    %v1436 = vrsqrt.pop %v1420
    %v1437 = vrsqrt.pop %v1421
    %v1438 = vrsqrt.pop %v1422
    %v1439 = vrsqrt.pop %v1423
    %v1440 = vmul.f32 %v1312, %v1424
    %v1441 = vmul.f32 %v1313, %v1425
    %v1442 = vmul.f32 %v1314, %v1426
    %v1443 = vmul.f32 %v1315, %v1427
    %v1444 = vmul.f32 %v1316, %v1428
    %v1445 = vmul.f32 %v1317, %v1429
    %v1446 = vmul.f32 %v1318, %v1430
    %v1447 = vmul.f32 %v1319, %v1431
    %v1448 = vmul.f32 %v1320, %v1432
    %v1449 = vmul.f32 %v1321, %v1433
    %v1450 = vmul.f32 %v1322, %v1434
    %v1451 = vmul.f32 %v1323, %v1435
    %v1452 = vmul.f32 %v1324, %v1436
    %v1453 = vmul.f32 %v1325, %v1437
    %v1454 = vmul.f32 %v1326, %v1438
    %v1455 = vmul.f32 %v1327, %v1439
    %v1457 = vlaneseq
    %v1458 = vshrl.u32 %v1457, 7
    %v1459 = vsub.s32 0, %v1458
    %v1460 = vrot.slane %v1245, %v1459
    %v1462 = vmul.f32 %v1440, %v1460
    %v1463 = vmul.f32 %v1441, %v1460
    %v1464 = vmul.f32 %v1442, %v1460
    %v1465 = vmul.f32 %v1443, %v1460
    %v1466 = vmul.f32 %v1444, %v1460
    %v1467 = vmul.f32 %v1445, %v1460
    %v1468 = vmul.f32 %v1446, %v1460
    %v1469 = vmul.f32 %v1447, %v1460
    %v1470 = vmul.f32 %v1448, %v1460
    %v1471 = vmul.f32 %v1449, %v1460
    %v1472 = vmul.f32 %v1450, %v1460
    %v1473 = vmul.f32 %v1451, %v1460
    %v1474 = vmul.f32 %v1452, %v1460
    %v1475 = vmul.f32 %v1453, %v1460
    %v1476 = vmul.f32 %v1454, %v1460
    %v1477 = vmul.f32 %v1455, %v1460
    %v1479 = vlaneseq
    %v1480 = vshrl.u32 %v1479, 7
    %v1481 = vsub.s32 0, %v1480
    %v1482 = vrot.slane %v1246, %v1481
    %v1484 = vadd.f32 %v1462, %v1482
    %v1485 = vadd.f32 %v1463, %v1482
    %v1486 = vadd.f32 %v1464, %v1482
    %v1487 = vadd.f32 %v1465, %v1482
    %v1488 = vadd.f32 %v1466, %v1482
    %v1489 = vadd.f32 %v1467, %v1482
    %v1490 = vadd.f32 %v1468, %v1482
    %v1491 = vadd.f32 %v1469, %v1482
    %v1492 = vadd.f32 %v1470, %v1482
    %v1493 = vadd.f32 %v1471, %v1482
    %v1494 = vadd.f32 %v1472, %v1482
    %v1495 = vadd.f32 %v1473, %v1482
    %v1496 = vadd.f32 %v1474, %v1482
    %v1497 = vadd.f32 %v1475, %v1482
    %v1498 = vadd.f32 %v1476, %v1482
    %v1499 = vadd.f32 %v1477, %v1482
    %v1500 = vpack.c.bf16 %v1485, %v1484
    %v1501 = vpack.c.bf16 %v1487, %v1486
    %v1502 = vpack.c.bf16 %v1489, %v1488
    %v1503 = vpack.c.bf16 %v1491, %v1490
    %v1504 = vpack.c.bf16 %v1493, %v1492
    %v1505 = vpack.c.bf16 %v1495, %v1494
    %v1506 = vpack.c.bf16 %v1497, %v1496
    %v1507 = vpack.c.bf16 %v1499, %v1498
    %v1508 = vld [vmem:[%s15] sm:$0xf]
    %v1509 = vld [vmem:[%s15 + $0x4] sm:$0xf]
    %v1510 = vld [vmem:[%s15 + $0x8] sm:$0xf]
    %v1511 = vld [vmem:[%s15 + $0xc] sm:$0xf]
    %v1512 = vld [vmem:[%s16] sm:$0x1]
    %v1514 = vlaneseq
    %v1515 = vshrl.u32 %v1514, 7
    %v1516 = vsub.s32 0, %v1515
    %v1517 = vrot.slane %v1512, %v1516
    %v1523 = vunpack.c.l.b16 %v1508
    %v1524 = vunpack.c.l.b16 %v1509
    %v1525 = vunpack.c.l.b16 %v1510
    %v1526 = vunpack.c.l.b16 %v1511
    %v1527 = vpack.c.b16 %v1524, %v1523
    %v1528 = vpack.c.b16 %v1526, %v1525
    %v1532 = vsel %vm142, %v1500, 0
    %v1535 = vsel %vm142, %v1501, 0
    %v1538 = vsel %vm142, %v1502, 0
    %v1541 = vsel %vm142, %v1503, 0
    %v1544 = vsel %vm142, %v1504, 0
    %v1547 = vsel %vm142, %v1505, 0
    %v1550 = vsel %vm142, %v1506, 0
    %v1553 = vsel %vm142, %v1507, 0
    %1555 = vmatprep.subr.bf16.mxu0 0
    %1556 = vmatpush1.bf16.msra.mxu0 %v1527
    %1557 = vmatprep.subr.bf16.mxu0 0
    %1558 = vmatpush1.bf16.msra.mxu0 %v1528
    %1559 = vmatprep.subr.bf16.mxu0 0
    %1560 = vmatpush1.bf16.msra.mxu0 0
    %1561 = vmatprep.subr.bf16.mxu0 0
    %1562 = vmatpush1.bf16.msra.mxu0 0
    %1563 = vmatprep.subr.bf16.mxu0 0
    %1564 = vmatpush1.bf16.msra.mxu0 0
    %1565 = vmatprep.subr.bf16.mxu0 0
    %1566 = vmatpush1.bf16.msra.mxu0 0
    %1567 = vmatprep.subr.bf16.mxu0 0
    %1568 = vmatpush1.bf16.msra.mxu0 0
    %1569 = vmatprep.subr.bf16.mxu0 0
    %1570 = vmatpush1.bf16.msra.mxu0 0
    %1571 = vmatprep.subr.bf16.mxu0 0
    %1572 = vmatpush1.bf16.msra.mxu0 0
    %1573 = vmatprep.subr.bf16.mxu0 0
    %1574 = vmatpush1.bf16.msra.mxu0 0
    %1575 = vmatprep.subr.bf16.mxu0 0
    %1576 = vmatpush1.bf16.msra.mxu0 0
    %1577 = vmatprep.subr.bf16.mxu0 0
    %1578 = vmatpush1.bf16.msra.mxu0 0
    %1579 = vmatprep.subr.bf16.mxu0 0
    %1580 = vmatpush1.bf16.msra.mxu0 0
    %1581 = vmatprep.subr.bf16.mxu0 0
    %1582 = vmatpush1.bf16.msra.mxu0 0
    %1583 = vmatprep.subr.bf16.mxu0 0
    %1584 = vmatpush1.bf16.msra.mxu0 0
    %1585 = vmatprep.subr.bf16.mxu0 0
    %1586 = vmatpush1.bf16.msra.mxu0 0
    %1587 = vmatprep.mubr.bf16.mxu0 0
    %1588 = vmatmul.mubr.bf16.gmra.mrb[0].mxu0 %v1532
    %v1589 = vpop.f32.mrb[0].mxu0
    %v1590 = vadd.f32 %v1517, %v1589
    %v1591 = vpop.f32.mrb[0].mxu0
    %v1592 = vpop.f32.mrb[0].mxu0
    %v1593 = vadd.f32 %v1517, %v1592
    %v1594 = vpop.f32.mrb[0].mxu0
    %1595 = vmatprep.mubr.bf16.mxu0 0
    %1596 = vmatmul.mubr.bf16.gmra.mrb[0].mxu0 %v1535
    %v1597 = vpop.f32.mrb[0].mxu0
    %v1598 = vadd.f32 %v1517, %v1597
    %v1599 = vpop.f32.mrb[0].mxu0
    %v1600 = vpop.f32.mrb[0].mxu0
    %v1601 = vadd.f32 %v1517, %v1600
    %v1602 = vpop.f32.mrb[0].mxu0
    %1603 = vmatprep.mubr.bf16.mxu0 0
    %1604 = vmatmul.mubr.bf16.gmra.mrb[0].mxu0 %v1538
    %v1605 = vpop.f32.mrb[0].mxu0
    %v1606 = vadd.f32 %v1517, %v1605
    %v1607 = vpop.f32.mrb[0].mxu0
    %v1608 = vpop.f32.mrb[0].mxu0
    %v1609 = vadd.f32 %v1517, %v1608
    %v1610 = vpop.f32.mrb[0].mxu0
    %1611 = vmatprep.mubr.bf16.mxu0 0
    %1612 = vmatmul.mubr.bf16.gmra.mrb[0].mxu0 %v1541
    %v1613 = vpop.f32.mrb[0].mxu0
    %v1614 = vadd.f32 %v1517, %v1613
    %v1615 = vpop.f32.mrb[0].mxu0
    %v1616 = vpop.f32.mrb[0].mxu0
    %v1617 = vadd.f32 %v1517, %v1616
    %v1618 = vpop.f32.mrb[0].mxu0
    %1619 = vmatprep.mubr.bf16.mxu0 0
    %1620 = vmatmul.mubr.bf16.gmra.mrb[0].mxu0 %v1544
    %v1621 = vpop.f32.mrb[0].mxu0
    %v1622 = vadd.f32 %v1517, %v1621
    %v1623 = vpop.f32.mrb[0].mxu0
    %v1624 = vpop.f32.mrb[0].mxu0
    %v1625 = vadd.f32 %v1517, %v1624
    %v1626 = vpop.f32.mrb[0].mxu0
    %1627 = vmatprep.mubr.bf16.mxu0 0
    %1628 = vmatmul.mubr.bf16.gmra.mrb[0].mxu0 %v1547
    %v1629 = vpop.f32.mrb[0].mxu0
    %v1630 = vadd.f32 %v1517, %v1629
    %v1631 = vpop.f32.mrb[0].mxu0
    %v1632 = vpop.f32.mrb[0].mxu0
    %v1633 = vadd.f32 %v1517, %v1632
    %v1634 = vpop.f32.mrb[0].mxu0
    %1635 = vmatprep.mubr.bf16.mxu0 0
    %1636 = vmatmul.mubr.bf16.gmra.mrb[0].mxu0 %v1550
    %v1637 = vpop.f32.mrb[0].mxu0
    %v1638 = vadd.f32 %v1517, %v1637
    %v1639 = vpop.f32.mrb[0].mxu0
    %v1640 = vpop.f32.mrb[0].mxu0
    %v1641 = vadd.f32 %v1517, %v1640
    %v1642 = vpop.f32.mrb[0].mxu0
    %1643 = vmatprep.mubr.bf16.mxu0 0
    %1644 = vmatmul.mubr.bf16.gmra.mrb[0].mxu0 %v1553
    %v1645 = vpop.f32.mrb[0].mxu0
    %v1646 = vadd.f32 %v1517, %v1645
    %v1647 = vpop.f32.mrb[0].mxu0
    %v1648 = vpop.f32.mrb[0].mxu0
    %v1649 = vadd.f32 %v1517, %v1648
    %v1650 = vpop.f32.mrb[0].mxu0
    %1651 = vdwg.mxu0
    %v1652 = vmul.f32 %v1590, 0.5
    %v1653 = vmul.f32 %v1593, 0.5
    %v1654 = vmul.f32 %v1598, 0.5
    %v1655 = vmul.f32 %v1601, 0.5
    %v1656 = vmul.f32 %v1606, 0.5
    %v1657 = vmul.f32 %v1609, 0.5
    %v1658 = vmul.f32 %v1614, 0.5
    %v1659 = vmul.f32 %v1617, 0.5
    %v1660 = vmul.f32 %v1622, 0.5
    %v1661 = vmul.f32 %v1625, 0.5
    %v1662 = vmul.f32 %v1630, 0.5
    %v1663 = vmul.f32 %v1633, 0.5
    %v1664 = vmul.f32 %v1638, 0.5
    %v1665 = vmul.f32 %v1641, 0.5
    %v1666 = vmul.f32 %v1646, 0.5
    %v1667 = vmul.f32 %v1649, 0.5
    %v1668 = vmul.f32 %v1590, 0.044715
    %v1669 = vmul.f32 %v1593, 0.044715
    %v1670 = vmul.f32 %v1598, 0.044715
    %v1671 = vmul.f32 %v1601, 0.044715
    %v1672 = vmul.f32 %v1606, 0.044715
    %v1673 = vmul.f32 %v1609, 0.044715
    %v1674 = vmul.f32 %v1614, 0.044715
    %v1675 = vmul.f32 %v1617, 0.044715
    %v1676 = vmul.f32 %v1622, 0.044715
    %v1677 = vmul.f32 %v1625, 0.044715
    %v1678 = vmul.f32 %v1630, 0.044715
    %v1679 = vmul.f32 %v1633, 0.044715
    %v1680 = vmul.f32 %v1638, 0.044715
    %v1681 = vmul.f32 %v1641, 0.044715
    %v1682 = vmul.f32 %v1646, 0.044715
    %v1683 = vmul.f32 %v1649, 0.044715
    %v1684 = vmul.f32 %v1668, %v1590
    %v1685 = vmul.f32 %v1669, %v1593
    %v1686 = vmul.f32 %v1670, %v1598
    %v1687 = vmul.f32 %v1671, %v1601
    %v1688 = vmul.f32 %v1672, %v1606
    %v1689 = vmul.f32 %v1673, %v1609
    %v1690 = vmul.f32 %v1674, %v1614
    %v1691 = vmul.f32 %v1675, %v1617
    %v1692 = vmul.f32 %v1676, %v1622
    %v1693 = vmul.f32 %v1677, %v1625
    %v1694 = vmul.f32 %v1678, %v1630
    %v1695 = vmul.f32 %v1679, %v1633
    %v1696 = vmul.f32 %v1680, %v1638
    %v1697 = vmul.f32 %v1681, %v1641
    %v1698 = vmul.f32 %v1682, %v1646
    %v1699 = vmul.f32 %v1683, %v1649
    %v1700 = vmul.f32 %v1684, %v1590
    %v1701 = vmul.f32 %v1685, %v1593
    %v1702 = vmul.f32 %v1686, %v1598
    %v1703 = vmul.f32 %v1687, %v1601
    %v1704 = vmul.f32 %v1688, %v1606
    %v1705 = vmul.f32 %v1689, %v1609
    %v1706 = vmul.f32 %v1690, %v1614
    %v1707 = vmul.f32 %v1691, %v1617
    %v1708 = vmul.f32 %v1692, %v1622
    %v1709 = vmul.f32 %v1693, %v1625
    %v1710 = vmul.f32 %v1694, %v1630
    %v1711 = vmul.f32 %v1695, %v1633
    %v1712 = vmul.f32 %v1696, %v1638
    %v1713 = vmul.f32 %v1697, %v1641
    %v1714 = vmul.f32 %v1698, %v1646
    %v1715 = vmul.f32 %v1699, %v1649
    %v1716 = vadd.f32 %v1590, %v1700
    %v1717 = vadd.f32 %v1593, %v1701
    %v1718 = vadd.f32 %v1598, %v1702
    %v1719 = vadd.f32 %v1601, %v1703
    %v1720 = vadd.f32 %v1606, %v1704
    %v1721 = vadd.f32 %v1609, %v1705
    %v1722 = vadd.f32 %v1614, %v1706
    %v1723 = vadd.f32 %v1617, %v1707
    %v1724 = vadd.f32 %v1622, %v1708
    %v1725 = vadd.f32 %v1625, %v1709
    %v1726 = vadd.f32 %v1630, %v1710
    %v1727 = vadd.f32 %v1633, %v1711
    %v1728 = vadd.f32 %v1638, %v1712
    %v1729 = vadd.f32 %v1641, %v1713
    %v1730 = vadd.f32 %v1646, %v1714
    %v1731 = vadd.f32 %v1649, %v1715
    %v1732 = vmul.f32 %v1716, 0.7978846
    %v1733 = vmul.f32 %v1717, 0.7978846
    %v1734 = vmul.f32 %v1718, 0.7978846
    %v1735 = vmul.f32 %v1719, 0.7978846
    %v1736 = vmul.f32 %v1720, 0.7978846
    %v1737 = vmul.f32 %v1721, 0.7978846
    %v1738 = vmul.f32 %v1722, 0.7978846
    %v1739 = vmul.f32 %v1723, 0.7978846
    %v1740 = vmul.f32 %v1724, 0.7978846
    %v1741 = vmul.f32 %v1725, 0.7978846
    %v1742 = vmul.f32 %v1726, 0.7978846
    %v1743 = vmul.f32 %v1727, 0.7978846
    %v1744 = vmul.f32 %v1728, 0.7978846
    %v1745 = vmul.f32 %v1729, 0.7978846
    %v1746 = vmul.f32 %v1730, 0.7978846
    %v1747 = vmul.f32 %v1731, 0.7978846
    %v1748 = vtanh.pop %v1732
    %v1749 = vtanh.pop %v1733
    %v1750 = vtanh.pop %v1734
    %v1751 = vtanh.pop %v1735
    %v1752 = vtanh.pop %v1736
    %v1753 = vtanh.pop %v1737
    %v1754 = vtanh.pop %v1738
    %v1755 = vtanh.pop %v1739
    %v1756 = vtanh.pop %v1740
    %v1757 = vtanh.pop %v1741
    %v1758 = vtanh.pop %v1742
    %v1759 = vtanh.pop %v1743
    %v1760 = vtanh.pop %v1744
    %v1761 = vtanh.pop %v1745
    %v1762 = vtanh.pop %v1746
    %v1763 = vtanh.pop %v1747
    %v1764 = vadd.f32 %v1748, 1.0
    %v1765 = vadd.f32 %v1749, 1.0
    %v1766 = vadd.f32 %v1750, 1.0
    %v1767 = vadd.f32 %v1751, 1.0
    %v1768 = vadd.f32 %v1752, 1.0
    %v1769 = vadd.f32 %v1753, 1.0
    %v1770 = vadd.f32 %v1754, 1.0
    %v1771 = vadd.f32 %v1755, 1.0
    %v1772 = vadd.f32 %v1756, 1.0
    %v1773 = vadd.f32 %v1757, 1.0
    %v1774 = vadd.f32 %v1758, 1.0
    %v1775 = vadd.f32 %v1759, 1.0
    %v1776 = vadd.f32 %v1760, 1.0
    %v1777 = vadd.f32 %v1761, 1.0
    %v1778 = vadd.f32 %v1762, 1.0
    %v1779 = vadd.f32 %v1763, 1.0
    %v1780 = vmul.f32 %v1652, %v1764
    %v1781 = vmul.f32 %v1653, %v1765
    %v1782 = vmul.f32 %v1654, %v1766
    %v1783 = vmul.f32 %v1655, %v1767
    %v1784 = vmul.f32 %v1656, %v1768
    %v1785 = vmul.f32 %v1657, %v1769
    %v1786 = vmul.f32 %v1658, %v1770
    %v1787 = vmul.f32 %v1659, %v1771
    %v1788 = vmul.f32 %v1660, %v1772
    %v1789 = vmul.f32 %v1661, %v1773
    %v1790 = vmul.f32 %v1662, %v1774
    %v1791 = vmul.f32 %v1663, %v1775
    %v1792 = vmul.f32 %v1664, %v1776
    %v1793 = vmul.f32 %v1665, %v1777
    %v1794 = vmul.f32 %v1666, %v1778
    %v1795 = vmul.f32 %v1667, %v1779
    %v1796 = vpack.c.bf16 %v1781, %v1780
    %v1797 = vpack.c.bf16 %v1783, %v1782
    %v1798 = vpack.c.bf16 %v1785, %v1784
    %v1799 = vpack.c.bf16 %v1787, %v1786
    %v1800 = vpack.c.bf16 %v1789, %v1788
    %v1801 = vpack.c.bf16 %v1791, %v1790
    %v1802 = vpack.c.bf16 %v1793, %v1792
    %v1803 = vpack.c.bf16 %v1795, %v1794
    %v1804 = vld [vmem:[%s17] sm:$0xf]
    %v1805 = vld [vmem:[%s17 + $0x4] sm:$0xf]
    %v1806 = vld [vmem:[%s17 + $0x8] sm:$0xf]
    %v1807 = vld [vmem:[%s17 + $0xc] sm:$0xf]
    %v1808 = vld [vmem:[%s18] sm:$0x1]
    %v1810 = vlaneseq
    %v1811 = vshrl.u32 %v1810, 7
    %v1812 = vsub.s32 0, %v1811
    %v1813 = vrot.slane %v1808, %v1812
    %v1819 = vunpack.c.l.b16 %v1804
    %v1820 = vunpack.c.l.b16 %v1805
    %v1821 = vunpack.c.l.b16 %v1806
    %v1822 = vunpack.c.l.b16 %v1807
    %v1823 = vpack.c.b16 %v1820, %v1819
    %v1824 = vpack.c.b16 %v1822, %v1821
    %v1828 = vsel %vm142, %v1796, 0
    %v1831 = vsel %vm142, %v1797, 0
    %v1834 = vsel %vm142, %v1798, 0
    %v1837 = vsel %vm142, %v1799, 0
    %v1840 = vsel %vm142, %v1800, 0
    %v1843 = vsel %vm142, %v1801, 0
    %v1846 = vsel %vm142, %v1802, 0
    %v1849 = vsel %vm142, %v1803, 0
    %1851 = vmatprep.subr.bf16.mxu0 0
    %1852 = vmatpush1.bf16.msra.mxu0 %v1823
    %1853 = vmatprep.subr.bf16.mxu0 0
    %1854 = vmatpush1.bf16.msra.mxu0 %v1824
    %1855 = vmatprep.subr.bf16.mxu0 0
    %1856 = vmatpush1.bf16.msra.mxu0 0
    %1857 = vmatprep.subr.bf16.mxu0 0
    %1858 = vmatpush1.bf16.msra.mxu0 0
    %1859 = vmatprep.subr.bf16.mxu0 0
    %1860 = vmatpush1.bf16.msra.mxu0 0
    %1861 = vmatprep.subr.bf16.mxu0 0
    %1862 = vmatpush1.bf16.msra.mxu0 0
    %1863 = vmatprep.subr.bf16.mxu0 0
    %1864 = vmatpush1.bf16.msra.mxu0 0
    %1865 = vmatprep.subr.bf16.mxu0 0
    %1866 = vmatpush1.bf16.msra.mxu0 0
    %1867 = vmatprep.subr.bf16.mxu0 0
    %1868 = vmatpush1.bf16.msra.mxu0 0
    %1869 = vmatprep.subr.bf16.mxu0 0
    %1870 = vmatpush1.bf16.msra.mxu0 0
    %1871 = vmatprep.subr.bf16.mxu0 0
    %1872 = vmatpush1.bf16.msra.mxu0 0
    %1873 = vmatprep.subr.bf16.mxu0 0
    %1874 = vmatpush1.bf16.msra.mxu0 0
    %1875 = vmatprep.subr.bf16.mxu0 0
    %1876 = vmatpush1.bf16.msra.mxu0 0
    %1877 = vmatprep.subr.bf16.mxu0 0
    %1878 = vmatpush1.bf16.msra.mxu0 0
    %1879 = vmatprep.subr.bf16.mxu0 0
    %1880 = vmatpush1.bf16.msra.mxu0 0
    %1881 = vmatprep.subr.bf16.mxu0 0
    %1882 = vmatpush1.bf16.msra.mxu0 0
    %1883 = vmatprep.mubr.bf16.mxu0 0
    %1884 = vmatmul.mubr.bf16.gmra.mrb[0].mxu0 %v1828
    %v1885 = vpop.f32.mrb[0].mxu0
    %v1886 = vadd.f32 %v1813, %v1885
    %v1887 = vpop.f32.mrb[0].mxu0
    %v1888 = vpop.f32.mrb[0].mxu0
    %v1889 = vadd.f32 %v1813, %v1888
    %v1890 = vpop.f32.mrb[0].mxu0
    %1891 = vmatprep.mubr.bf16.mxu0 0
    %1892 = vmatmul.mubr.bf16.gmra.mrb[0].mxu0 %v1831
    %v1893 = vpop.f32.mrb[0].mxu0
    %v1894 = vadd.f32 %v1813, %v1893
    %v1895 = vpop.f32.mrb[0].mxu0
    %v1896 = vpop.f32.mrb[0].mxu0
    %v1897 = vadd.f32 %v1813, %v1896
    %v1898 = vpop.f32.mrb[0].mxu0
    %1899 = vmatprep.mubr.bf16.mxu0 0
    %1900 = vmatmul.mubr.bf16.gmra.mrb[0].mxu0 %v1834
    %v1901 = vpop.f32.mrb[0].mxu0
    %v1902 = vadd.f32 %v1813, %v1901
    %v1903 = vpop.f32.mrb[0].mxu0
    %v1904 = vpop.f32.mrb[0].mxu0
    %v1905 = vadd.f32 %v1813, %v1904
    %v1906 = vpop.f32.mrb[0].mxu0
    %1907 = vmatprep.mubr.bf16.mxu0 0
    %1908 = vmatmul.mubr.bf16.gmra.mrb[0].mxu0 %v1837
    %v1909 = vpop.f32.mrb[0].mxu0
    %v1910 = vadd.f32 %v1813, %v1909
    %v1911 = vpop.f32.mrb[0].mxu0
    %v1912 = vpop.f32.mrb[0].mxu0
    %v1913 = vadd.f32 %v1813, %v1912
    %v1914 = vpop.f32.mrb[0].mxu0
    %1915 = vmatprep.mubr.bf16.mxu0 0
    %1916 = vmatmul.mubr.bf16.gmra.mrb[0].mxu0 %v1840
    %v1917 = vpop.f32.mrb[0].mxu0
    %v1918 = vadd.f32 %v1813, %v1917
    %v1919 = vpop.f32.mrb[0].mxu0
    %v1920 = vpop.f32.mrb[0].mxu0
    %v1921 = vadd.f32 %v1813, %v1920
    %v1922 = vpop.f32.mrb[0].mxu0
    %1923 = vmatprep.mubr.bf16.mxu0 0
    %1924 = vmatmul.mubr.bf16.gmra.mrb[0].mxu0 %v1843
    %v1925 = vpop.f32.mrb[0].mxu0
    %v1926 = vadd.f32 %v1813, %v1925
    %v1927 = vpop.f32.mrb[0].mxu0
    %v1928 = vpop.f32.mrb[0].mxu0
    %v1929 = vadd.f32 %v1813, %v1928
    %v1930 = vpop.f32.mrb[0].mxu0
    %1931 = vmatprep.mubr.bf16.mxu0 0
    %1932 = vmatmul.mubr.bf16.gmra.mrb[0].mxu0 %v1846
    %v1933 = vpop.f32.mrb[0].mxu0
    %v1934 = vadd.f32 %v1813, %v1933
    %v1935 = vpop.f32.mrb[0].mxu0
    %v1936 = vpop.f32.mrb[0].mxu0
    %v1937 = vadd.f32 %v1813, %v1936
    %v1938 = vpop.f32.mrb[0].mxu0
    %1939 = vmatprep.mubr.bf16.mxu0 0
    %1940 = vmatmul.mubr.bf16.gmra.mrb[0].mxu0 %v1849
    %v1941 = vpop.f32.mrb[0].mxu0
    %v1942 = vadd.f32 %v1813, %v1941
    %v1943 = vpop.f32.mrb[0].mxu0
    %v1944 = vpop.f32.mrb[0].mxu0
    %v1945 = vadd.f32 %v1813, %v1944
    %v1946 = vpop.f32.mrb[0].mxu0
    %1947 = vdwg.mxu0
    %v1948 = vadd.f32 %v1886, %v1229
    %v1949 = vadd.f32 %v1889, %v1230
    %v1950 = vadd.f32 %v1894, %v1231
    %v1951 = vadd.f32 %v1897, %v1232
    %v1952 = vadd.f32 %v1902, %v1233
    %v1953 = vadd.f32 %v1905, %v1234
    %v1954 = vadd.f32 %v1910, %v1235
    %v1955 = vadd.f32 %v1913, %v1236
    %v1956 = vadd.f32 %v1918, %v1237
    %v1957 = vadd.f32 %v1921, %v1238
    %v1958 = vadd.f32 %v1926, %v1239
    %v1959 = vadd.f32 %v1929, %v1240
    %v1960 = vadd.f32 %v1934, %v1241
    %v1961 = vadd.f32 %v1937, %v1242
    %v1962 = vadd.f32 %v1942, %v1243
    %v1963 = vadd.f32 %v1945, %v1244
    %v1964 = vld [vmem:[%s19] sm:$0x1]
    %v1965 = vld [vmem:[%s20] sm:$0x1]
    %v1966 = vsel %vm142, %v1948, 0.0
    %1967 = vadd.xlane.f32.xlu0 %v1966
    %v1968 = vpop.xlane.xlu0 %1967
    %v1969 = vsel %vm142, %v1949, 0.0
    %1970 = vadd.xlane.f32.xlu0 %v1969
    %v1971 = vpop.xlane.xlu0 %1970
    %v1972 = vsel %vm142, %v1950, 0.0
    %1973 = vadd.xlane.f32.xlu0 %v1972
    %v1974 = vpop.xlane.xlu0 %1973
    %v1975 = vsel %vm142, %v1951, 0.0
    %1976 = vadd.xlane.f32.xlu0 %v1975
    %v1977 = vpop.xlane.xlu0 %1976
    %v1978 = vsel %vm142, %v1952, 0.0
    %1979 = vadd.xlane.f32.xlu0 %v1978
    %v1980 = vpop.xlane.xlu0 %1979
    %v1981 = vsel %vm142, %v1953, 0.0
    %1982 = vadd.xlane.f32.xlu0 %v1981
    %v1983 = vpop.xlane.xlu0 %1982
    %v1984 = vsel %vm142, %v1954, 0.0
    %1985 = vadd.xlane.f32.xlu0 %v1984
    %v1986 = vpop.xlane.xlu0 %1985
    %v1987 = vsel %vm142, %v1955, 0.0
    %1988 = vadd.xlane.f32.xlu0 %v1987
    %v1989 = vpop.xlane.xlu0 %1988
    %v1990 = vsel %vm142, %v1956, 0.0
    %1991 = vadd.xlane.f32.xlu0 %v1990
    %v1992 = vpop.xlane.xlu0 %1991
    %v1993 = vsel %vm142, %v1957, 0.0
    %1994 = vadd.xlane.f32.xlu0 %v1993
    %v1995 = vpop.xlane.xlu0 %1994
    %v1996 = vsel %vm142, %v1958, 0.0
    %1997 = vadd.xlane.f32.xlu0 %v1996
    %v1998 = vpop.xlane.xlu0 %1997
    %v1999 = vsel %vm142, %v1959, 0.0
    %2000 = vadd.xlane.f32.xlu0 %v1999
    %v2001 = vpop.xlane.xlu0 %2000
    %v2002 = vsel %vm142, %v1960, 0.0
    %2003 = vadd.xlane.f32.xlu0 %v2002
    %v2004 = vpop.xlane.xlu0 %2003
    %v2005 = vsel %vm142, %v1961, 0.0
    %2006 = vadd.xlane.f32.xlu0 %v2005
    %v2007 = vpop.xlane.xlu0 %2006
    %v2008 = vsel %vm142, %v1962, 0.0
    %2009 = vadd.xlane.f32.xlu0 %v2008
    %v2010 = vpop.xlane.xlu0 %2009
    %v2011 = vsel %vm142, %v1963, 0.0
    %2012 = vadd.xlane.f32.xlu0 %v2011
    %v2013 = vpop.xlane.xlu0 %2012
    %v2014 = vmul.f32 %v1968, %v1295
    %v2015 = vmul.f32 %v1971, %v1295
    %v2016 = vmul.f32 %v1974, %v1295
    %v2017 = vmul.f32 %v1977, %v1295
    %v2018 = vmul.f32 %v1980, %v1295
    %v2019 = vmul.f32 %v1983, %v1295
    %v2020 = vmul.f32 %v1986, %v1295
    %v2021 = vmul.f32 %v1989, %v1295
    %v2022 = vmul.f32 %v1992, %v1295
    %v2023 = vmul.f32 %v1995, %v1295
    %v2024 = vmul.f32 %v1998, %v1295
    %v2025 = vmul.f32 %v2001, %v1295
    %v2026 = vmul.f32 %v2004, %v1295
    %v2027 = vmul.f32 %v2007, %v1295
    %v2028 = vmul.f32 %v2010, %v1295
    %v2029 = vmul.f32 %v2013, %v1295
    %v2030 = vsub.f32 %v1948, %v2014
    %v2031 = vsub.f32 %v1949, %v2015
    %v2032 = vsub.f32 %v1950, %v2016
    %v2033 = vsub.f32 %v1951, %v2017
    %v2034 = vsub.f32 %v1952, %v2018
    %v2035 = vsub.f32 %v1953, %v2019
    %v2036 = vsub.f32 %v1954, %v2020
    %v2037 = vsub.f32 %v1955, %v2021
    %v2038 = vsub.f32 %v1956, %v2022
    %v2039 = vsub.f32 %v1957, %v2023
    %v2040 = vsub.f32 %v1958, %v2024
    %v2041 = vsub.f32 %v1959, %v2025
    %v2042 = vsub.f32 %v1960, %v2026
    %v2043 = vsub.f32 %v1961, %v2027
    %v2044 = vsub.f32 %v1962, %v2028
    %v2045 = vsub.f32 %v1963, %v2029
    %v2046 = vmul.f32 %v2030, %v2030
    %v2047 = vmul.f32 %v2031, %v2031
    %v2048 = vmul.f32 %v2032, %v2032
    %v2049 = vmul.f32 %v2033, %v2033
    %v2050 = vmul.f32 %v2034, %v2034
    %v2051 = vmul.f32 %v2035, %v2035
    %v2052 = vmul.f32 %v2036, %v2036
    %v2053 = vmul.f32 %v2037, %v2037
    %v2054 = vmul.f32 %v2038, %v2038
    %v2055 = vmul.f32 %v2039, %v2039
    %v2056 = vmul.f32 %v2040, %v2040
    %v2057 = vmul.f32 %v2041, %v2041
    %v2058 = vmul.f32 %v2042, %v2042
    %v2059 = vmul.f32 %v2043, %v2043
    %v2060 = vmul.f32 %v2044, %v2044
    %v2061 = vmul.f32 %v2045, %v2045
    %v2062 = vsel %vm142, %v2046, 0.0
    %2063 = vadd.xlane.f32.xlu0 %v2062
    %v2064 = vpop.xlane.xlu0 %2063
    %v2065 = vsel %vm142, %v2047, 0.0
    %2066 = vadd.xlane.f32.xlu0 %v2065
    %v2067 = vpop.xlane.xlu0 %2066
    %v2068 = vsel %vm142, %v2048, 0.0
    %2069 = vadd.xlane.f32.xlu0 %v2068
    %v2070 = vpop.xlane.xlu0 %2069
    %v2071 = vsel %vm142, %v2049, 0.0
    %2072 = vadd.xlane.f32.xlu0 %v2071
    %v2073 = vpop.xlane.xlu0 %2072
    %v2074 = vsel %vm142, %v2050, 0.0
    %2075 = vadd.xlane.f32.xlu0 %v2074
    %v2076 = vpop.xlane.xlu0 %2075
    %v2077 = vsel %vm142, %v2051, 0.0
    %2078 = vadd.xlane.f32.xlu0 %v2077
    %v2079 = vpop.xlane.xlu0 %2078
    %v2080 = vsel %vm142, %v2052, 0.0
    %2081 = vadd.xlane.f32.xlu0 %v2080
    %v2082 = vpop.xlane.xlu0 %2081
    %v2083 = vsel %vm142, %v2053, 0.0
    %2084 = vadd.xlane.f32.xlu0 %v2083
    %v2085 = vpop.xlane.xlu0 %2084
    %v2086 = vsel %vm142, %v2054, 0.0
    %2087 = vadd.xlane.f32.xlu0 %v2086
    %v2088 = vpop.xlane.xlu0 %2087
    %v2089 = vsel %vm142, %v2055, 0.0
    %2090 = vadd.xlane.f32.xlu0 %v2089
    %v2091 = vpop.xlane.xlu0 %2090
    %v2092 = vsel %vm142, %v2056, 0.0
    %2093 = vadd.xlane.f32.xlu0 %v2092
    %v2094 = vpop.xlane.xlu0 %2093
    %v2095 = vsel %vm142, %v2057, 0.0
    %2096 = vadd.xlane.f32.xlu0 %v2095
    %v2097 = vpop.xlane.xlu0 %2096
    %v2098 = vsel %vm142, %v2058, 0.0
    %2099 = vadd.xlane.f32.xlu0 %v2098
    %v2100 = vpop.xlane.xlu0 %2099
    %v2101 = vsel %vm142, %v2059, 0.0
    %2102 = vadd.xlane.f32.xlu0 %v2101
    %v2103 = vpop.xlane.xlu0 %2102
    %v2104 = vsel %vm142, %v2060, 0.0
    %2105 = vadd.xlane.f32.xlu0 %v2104
    %v2106 = vpop.xlane.xlu0 %2105
    %v2107 = vsel %vm142, %v2061, 0.0
    %2108 = vadd.xlane.f32.xlu0 %v2107
    %v2109 = vpop.xlane.xlu0 %2108
    %v2110 = vmul.f32 %v2064, %v1295
    %v2111 = vmul.f32 %v2067, %v1295
    %v2112 = vmul.f32 %v2070, %v1295
    %v2113 = vmul.f32 %v2073, %v1295
    %v2114 = vmul.f32 %v2076, %v1295
    %v2115 = vmul.f32 %v2079, %v1295
    %v2116 = vmul.f32 %v2082, %v1295
    %v2117 = vmul.f32 %v2085, %v1295
    %v2118 = vmul.f32 %v2088, %v1295
    %v2119 = vmul.f32 %v2091, %v1295
    %v2120 = vmul.f32 %v2094, %v1295
    %v2121 = vmul.f32 %v2097, %v1295
    %v2122 = vmul.f32 %v2100, %v1295
    %v2123 = vmul.f32 %v2103, %v1295
    %v2124 = vmul.f32 %v2106, %v1295
    %v2125 = vmul.f32 %v2109, %v1295
    %v2126 = vadd.f32 %v2110, 1e-05
    %v2127 = vadd.f32 %v2111, 1e-05
    %v2128 = vadd.f32 %v2112, 1e-05
    %v2129 = vadd.f32 %v2113, 1e-05
    %v2130 = vadd.f32 %v2114, 1e-05
    %v2131 = vadd.f32 %v2115, 1e-05
    %v2132 = vadd.f32 %v2116, 1e-05
    %v2133 = vadd.f32 %v2117, 1e-05
    %v2134 = vadd.f32 %v2118, 1e-05
    %v2135 = vadd.f32 %v2119, 1e-05
    %v2136 = vadd.f32 %v2120, 1e-05
    %v2137 = vadd.f32 %v2121, 1e-05
    %v2138 = vadd.f32 %v2122, 1e-05
    %v2139 = vadd.f32 %v2123, 1e-05
    %v2140 = vadd.f32 %v2124, 1e-05
    %v2141 = vadd.f32 %v2125, 1e-05
    %v2142 = vrsqrt.pop %v2126
    %v2143 = vrsqrt.pop %v2127
    %v2144 = vrsqrt.pop %v2128
    %v2145 = vrsqrt.pop %v2129
    %v2146 = vrsqrt.pop %v2130
    %v2147 = vrsqrt.pop %v2131
    %v2148 = vrsqrt.pop %v2132
    %v2149 = vrsqrt.pop %v2133
    %v2150 = vrsqrt.pop %v2134
    %v2151 = vrsqrt.pop %v2135
    %v2152 = vrsqrt.pop %v2136
    %v2153 = vrsqrt.pop %v2137
    %v2154 = vrsqrt.pop %v2138
    %v2155 = vrsqrt.pop %v2139
    %v2156 = vrsqrt.pop %v2140
    %v2157 = vrsqrt.pop %v2141
    %v2158 = vmul.f32 %v2030, %v2142
    %v2159 = vmul.f32 %v2031, %v2143
    %v2160 = vmul.f32 %v2032, %v2144
    %v2161 = vmul.f32 %v2033, %v2145
    %v2162 = vmul.f32 %v2034, %v2146
    %v2163 = vmul.f32 %v2035, %v2147
    %v2164 = vmul.f32 %v2036, %v2148
    %v2165 = vmul.f32 %v2037, %v2149
    %v2166 = vmul.f32 %v2038, %v2150
    %v2167 = vmul.f32 %v2039, %v2151
    %v2168 = vmul.f32 %v2040, %v2152
    %v2169 = vmul.f32 %v2041, %v2153
    %v2170 = vmul.f32 %v2042, %v2154
    %v2171 = vmul.f32 %v2043, %v2155
    %v2172 = vmul.f32 %v2044, %v2156
    %v2173 = vmul.f32 %v2045, %v2157
    %v2175 = vlaneseq
    %v2176 = vshrl.u32 %v2175, 7
    %v2177 = vsub.s32 0, %v2176
    %v2178 = vrot.slane %v1964, %v2177
    %v2180 = vmul.f32 %v2158, %v2178
    %v2181 = vmul.f32 %v2159, %v2178
    %v2182 = vmul.f32 %v2160, %v2178
    %v2183 = vmul.f32 %v2161, %v2178
    %v2184 = vmul.f32 %v2162, %v2178
    %v2185 = vmul.f32 %v2163, %v2178
    %v2186 = vmul.f32 %v2164, %v2178
    %v2187 = vmul.f32 %v2165, %v2178
    %v2188 = vmul.f32 %v2166, %v2178
    %v2189 = vmul.f32 %v2167, %v2178
    %v2190 = vmul.f32 %v2168, %v2178
    %v2191 = vmul.f32 %v2169, %v2178
    %v2192 = vmul.f32 %v2170, %v2178
    %v2193 = vmul.f32 %v2171, %v2178
    %v2194 = vmul.f32 %v2172, %v2178
    %v2195 = vmul.f32 %v2173, %v2178
    %v2197 = vlaneseq
    %v2198 = vshrl.u32 %v2197, 7
    %v2199 = vsub.s32 0, %v2198
    %v2200 = vrot.slane %v1965, %v2199
    %v2202 = vadd.f32 %v2180, %v2200
    %v2203 = vadd.f32 %v2181, %v2200
    %v2204 = vadd.f32 %v2182, %v2200
    %v2205 = vadd.f32 %v2183, %v2200
    %v2206 = vadd.f32 %v2184, %v2200
    %v2207 = vadd.f32 %v2185, %v2200
    %v2208 = vadd.f32 %v2186, %v2200
    %v2209 = vadd.f32 %v2187, %v2200
    %v2210 = vadd.f32 %v2188, %v2200
    %v2211 = vadd.f32 %v2189, %v2200
    %v2212 = vadd.f32 %v2190, %v2200
    %v2213 = vadd.f32 %v2191, %v2200
    %v2214 = vadd.f32 %v2192, %v2200
    %v2215 = vadd.f32 %v2193, %v2200
    %v2216 = vadd.f32 %v2194, %v2200
    %v2217 = vadd.f32 %v2195, %v2200
    %v2218 = vld [vmem:[%s3] sm:$0xff]
    %v2219 = vld [vmem:[%s3 + $0x8] sm:$0xff]
    %v2220 = vld [vmem:[%s3 + $0x10] sm:$0xff]
    %v2221 = vld [vmem:[%s3 + $0x18] sm:$0xff]
    %v2222 = vld [vmem:[%s3 + $0x20] sm:$0xff]
    %v2223 = vld [vmem:[%s3 + $0x28] sm:$0xff]
    %v2224 = vld [vmem:[%s3 + $0x30] sm:$0xff]
    %v2225 = vld [vmem:[%s3 + $0x38] sm:$0xff]
    %v2226 = vld [vmem:[%s3 + $0x40] sm:$0xff]
    %v2227 = vld [vmem:[%s3 + $0x48] sm:$0xff]
    %v2228 = vld [vmem:[%s3 + $0x50] sm:$0xff]
    %v2229 = vld [vmem:[%s3 + $0x58] sm:$0xff]
    %v2230 = vld [vmem:[%s3 + $0x60] sm:$0xff]
    %v2231 = vld [vmem:[%s3 + $0x68] sm:$0xff]
    %v2232 = vld [vmem:[%s3 + $0x70] sm:$0xff]
    %v2233 = vld [vmem:[%s3 + $0x78] sm:$0xff]
    %v2234 = vsub.f32 %v2202, %v110
    %v2235 = vsub.f32 %v2203, %v111
    %v2236 = vsub.f32 %v2204, %v112
    %v2237 = vsub.f32 %v2205, %v113
    %v2238 = vsub.f32 %v2206, %v114
    %v2239 = vsub.f32 %v2207, %v115
    %v2240 = vsub.f32 %v2208, %v116
    %v2241 = vsub.f32 %v2209, %v117
    %v2242 = vsub.f32 %v2210, %v118
    %v2243 = vsub.f32 %v2211, %v119
    %v2244 = vsub.f32 %v2212, %v120
    %v2245 = vsub.f32 %v2213, %v121
    %v2246 = vsub.f32 %v2214, %v122
    %v2247 = vsub.f32 %v2215, %v123
    %v2248 = vsub.f32 %v2216, %v124
    %v2249 = vsub.f32 %v2217, %v125
    %2251 = vset.pattern.permute.xlu0 0
    %2252 = vperm.xlu0 %2251, %v2218
    %v2253 = vpop.permute.xlu0 %2252
    %2256 = vset.pattern.permute.xlu0 0
    %2257 = vperm.xlu0 %2256, %v2219
    %v2258 = vpop.permute.xlu0 %2257
    %2261 = vset.pattern.permute.xlu0 0
    %2262 = vperm.xlu0 %2261, %v2220
    %v2263 = vpop.permute.xlu0 %2262
    %2266 = vset.pattern.permute.xlu0 0
    %2267 = vperm.xlu0 %2266, %v2221
    %v2268 = vpop.permute.xlu0 %2267
    %2271 = vset.pattern.permute.xlu0 0
    %2272 = vperm.xlu0 %2271, %v2222
    %v2273 = vpop.permute.xlu0 %2272
    %2276 = vset.pattern.permute.xlu0 0
    %2277 = vperm.xlu0 %2276, %v2223
    %v2278 = vpop.permute.xlu0 %2277
    %2281 = vset.pattern.permute.xlu0 0
    %2282 = vperm.xlu0 %2281, %v2224
    %v2283 = vpop.permute.xlu0 %2282
    %2286 = vset.pattern.permute.xlu0 0
    %2287 = vperm.xlu0 %2286, %v2225
    %v2288 = vpop.permute.xlu0 %2287
    %2291 = vset.pattern.permute.xlu0 0
    %2292 = vperm.xlu0 %2291, %v2226
    %v2293 = vpop.permute.xlu0 %2292
    %2296 = vset.pattern.permute.xlu0 0
    %2297 = vperm.xlu0 %2296, %v2227
    %v2298 = vpop.permute.xlu0 %2297
    %2301 = vset.pattern.permute.xlu0 0
    %2302 = vperm.xlu0 %2301, %v2228
    %v2303 = vpop.permute.xlu0 %2302
    %2306 = vset.pattern.permute.xlu0 0
    %2307 = vperm.xlu0 %2306, %v2229
    %v2308 = vpop.permute.xlu0 %2307
    %2311 = vset.pattern.permute.xlu0 0
    %2312 = vperm.xlu0 %2311, %v2230
    %v2313 = vpop.permute.xlu0 %2312
    %2316 = vset.pattern.permute.xlu0 0
    %2317 = vperm.xlu0 %2316, %v2231
    %v2318 = vpop.permute.xlu0 %2317
    %2321 = vset.pattern.permute.xlu0 0
    %2322 = vperm.xlu0 %2321, %v2232
    %v2323 = vpop.permute.xlu0 %2322
    %2326 = vset.pattern.permute.xlu0 0
    %2327 = vperm.xlu0 %2326, %v2233
    %v2328 = vpop.permute.xlu0 %2327
    %v2330 = vmul.f32 %v2253, %v2234
    %v2331 = vmul.f32 %v2258, %v2235
    %v2332 = vmul.f32 %v2263, %v2236
    %v2333 = vmul.f32 %v2268, %v2237
    %v2334 = vmul.f32 %v2273, %v2238
    %v2335 = vmul.f32 %v2278, %v2239
    %v2336 = vmul.f32 %v2283, %v2240
    %v2337 = vmul.f32 %v2288, %v2241
    %v2338 = vmul.f32 %v2293, %v2242
    %v2339 = vmul.f32 %v2298, %v2243
    %v2340 = vmul.f32 %v2303, %v2244
    %v2341 = vmul.f32 %v2308, %v2245
    %v2342 = vmul.f32 %v2313, %v2246
    %v2343 = vmul.f32 %v2318, %v2247
    %v2344 = vmul.f32 %v2323, %v2248
    %v2345 = vmul.f32 %v2328, %v2249
    %v2346 = vadd.f32 %v110, %v2330
    %v2347 = vadd.f32 %v111, %v2331
    %v2348 = vadd.f32 %v112, %v2332
    %v2349 = vadd.f32 %v113, %v2333
    %v2350 = vadd.f32 %v114, %v2334
    %v2351 = vadd.f32 %v115, %v2335
    %v2352 = vadd.f32 %v116, %v2336
    %v2353 = vadd.f32 %v117, %v2337
    %v2354 = vadd.f32 %v118, %v2338
    %v2355 = vadd.f32 %v119, %v2339
    %v2356 = vadd.f32 %v120, %v2340
    %v2357 = vadd.f32 %v121, %v2341
    %v2358 = vadd.f32 %v122, %v2342
    %v2359 = vadd.f32 %v123, %v2343
    %v2360 = vadd.f32 %v124, %v2344
    %v2361 = vadd.f32 %v125, %v2345
    %2362 = vst.msk [vmem:[%s21] sm:$0xff] %vm142, %v2346
    %2363 = vst.msk [vmem:[%s21 + $0x8] sm:$0xff] %vm142, %v2347
    %2364 = vst.msk [vmem:[%s21 + $0x10] sm:$0xff] %vm142, %v2348
    %2365 = vst.msk [vmem:[%s21 + $0x18] sm:$0xff] %vm142, %v2349
    %2366 = vst.msk [vmem:[%s21 + $0x20] sm:$0xff] %vm142, %v2350
    %2367 = vst.msk [vmem:[%s21 + $0x28] sm:$0xff] %vm142, %v2351
    %2368 = vst.msk [vmem:[%s21 + $0x30] sm:$0xff] %vm142, %v2352
    %2369 = vst.msk [vmem:[%s21 + $0x38] sm:$0xff] %vm142, %v2353
    %2370 = vst.msk [vmem:[%s21 + $0x40] sm:$0xff] %vm142, %v2354
    %2371 = vst.msk [vmem:[%s21 + $0x48] sm:$0xff] %vm142, %v2355
    %2372 = vst.msk [vmem:[%s21 + $0x50] sm:$0xff] %vm142, %v2356
    %2373 = vst.msk [vmem:[%s21 + $0x58] sm:$0xff] %vm142, %v2357
    %2374 = vst.msk [vmem:[%s21 + $0x60] sm:$0xff] %vm142, %v2358
    %2375 = vst.msk [vmem:[%s21 + $0x68] sm:$0xff] %vm142, %v2359
    %2376 = vst.msk [vmem:[%s21 + $0x70] sm:$0xff] %vm142, %v2360
    %2377 = vst.msk [vmem:[%s21 + $0x78] sm:$0xff] %vm142, %v2361
  $region89: #{face_postfuse.1} parent=0 // pred_fallthru
    _
  // Predicated region
  $region90: #{face_postfuse.1} parent=0 // pred_check
    _
  $region91: #{face_postfuse.1} parent=0 // pred_check_branch
    %2379 = sbr.rel (0) target = $region93
  $region92: #{face_postfuse.1} parent=0 // pred_region
    _
  $region93: #{face_postfuse.1} parent=0 // pred_fallthru
    _
  // Predicated region
  $region94: #{face_postfuse.1} parent=0 // pred_check
    _
  $region95: #{face_postfuse.1} parent=0 // pred_check_branch
    %2381 = sbr.rel (0) target = $region97
  $region96: #{face_postfuse.1} parent=0 // pred_region
    _
  $region97: #{face_postfuse.1} parent=0 // pred_fallthru
    _

</llo_original>
